<compile_context>
chip_gen: v7x
topology: tpu7x:2x2x1
jax: 0.10.0
libtpu: 0.0.40
codegen_flags: <defaults>
</compile_context>

<pallas_src>
import functools

import jax
import jax.numpy as jnp
from jax.experimental import pallas as pl
from jax.experimental.pallas import tpu as pltpu


def _round_up(x, m):
    return (x + m - 1) // m * m


def _vmem_limit_bytes():
    """Generation-aware VMEM budget (v7x: 64 MiB physical, v5e/v6e: 128 MiB)."""
    cap = 64 * 1024 * 1024
    try:
        cap = int(getattr(pltpu.get_tpu_info(), "vmem_capacity_bytes", cap))
    except Exception:
        pass
    # Leave headroom for compiler scratch; never ask for more than ~100 MiB
    # (v5e/v6e) and ~48 MiB on v7x.
    return min(cap * 3 // 4, 100 * 1024 * 1024)


def _pick_tile_rows(H, W, C_in, Cp, K, inter_bytes, vmem_budget):
    """Largest row tile (dividing H, sublane-friendly) that fits the budget."""
    halo = K // 2
    best = None
    for tr in range(1, H + 1):
        if H % tr:
            continue
        if (tr * W) % 8 != 0 and tr != H:
            continue
        need = (2 * tr * W * C_in * 2                       # x tile, dbl-buffered
                + 4 * W * C_in * 2                          # halo rows
                + (tr + 2 * halo) * (W + 2 * halo) * C_in * 2   # haloed scratch
                + 2 * K * K * C_in * Cp * 2                 # weights (resident)
                + tr * W * Cp * 4                           # f32 accumulator
                + 2 * tr * W * Cp * inter_bytes             # conv-out tile
                + 4 * 2 * Cp * 4)                           # stats tiles
        if need <= vmem_budget:
            best = tr
    if best is None:
        raise ValueError("no row tile fits the VMEM budget")
    return best


# --------------------------------------------------------------------------
# Pass 1: conv (per-tap matmuls) + per-tile GroupNorm statistics.
# --------------------------------------------------------------------------
def _conv_stats_kernel(x_top_ref, x_mid_ref, x_bot_ref, w_ref,
                       y_ref, stats_ref, xe_ref,
                       *, K, TR, W, C_in, n_tiles, inv_tile):
    halo = K // 2
    Cp = w_ref.shape[-1]
    r = pl.program_id(1)

    if halo:
        # Haloed input tile.  Only the borders are zeroed (the interior is
        # fully overwritten), avoiding a full-tile memset.
        zero_col = jnp.zeros((TR + 2 * halo, halo, C_in), xe_ref.dtype)
        xe_ref[:, :halo, :] = zero_col
        xe_ref[:, halo + W:, :] = zero_col
        xe_ref[halo:halo + TR, halo:halo + W, :] = x_mid_ref[0]
        top = jnp.where(r > 0, x_top_ref[0], jnp.zeros_like(x_top_ref[0]))
        xe_ref[:halo, halo:halo + W, :] = top
        bot = jnp.where(r < n_tiles - 1, x_bot_ref[0],
                        jnp.zeros_like(x_bot_ref[0]))
        xe_ref[halo + TR:, halo:halo + W, :] = bot

    # K*K per-tap matmuls, bf16 operands with f32 accumulation (no im2col).
    acc = jnp.zeros((TR * W, Cp), jnp.float32)
    for ky in range(K):
        for kx in range(K):
            if halo:
                xt = xe_ref[ky:ky + TR, kx:kx + W, :]
            else:
                xt = x_mid_ref[0]
            xt = xt.reshape(TR * W, C_in)
            acc = acc + jnp.dot(xt, w_ref[ky * K + kx],
                                preferred_element_type=jnp.float32)

    # Per-tile, per-channel centered statistics (mean, M2) for a numerically
    # robust cross-tile combine (Chan / parallel Welford) in the wrapper.
    mean_c = jnp.sum(acc, axis=0, keepdims=True) * inv_tile      # (1, Cp)
    d = acc - mean_c
    m2_c = jnp.sum(d * d, axis=0, keepdims=True)                 # (1, Cp)
    stats_ref[0, 0, 0:1, :] = mean_c
    stats_ref[0, 0, 1:2, :] = m2_c

    y_ref[...] = acc[None].astype(y_ref.dtype)


# --------------------------------------------------------------------------
# Pass 2: apply the per-sample GroupNorm affine (one FMA per element).
# --------------------------------------------------------------------------
def _norm_kernel(y_ref, scale_ref, shift_ref, o_ref):
    y = y_ref[...].astype(jnp.float32)                  # (1, TR*W, Cp)
    o_ref[...] = (y * scale_ref[...] + shift_ref[...]).astype(o_ref.dtype)


def _combine_groupnorm_stats(stats, gamma, beta, C_out, groups, eps,
                             chunk_count):
    """Chan combine of per-tile, per-channel (mean, M2) into per-sample
    per-channel scale/shift.  Tiny (N, T, C) arrays — plain JAX."""
    mean_ct = stats[:, :, 0, :C_out]                              # (N, T, C)
    m2_ct = stats[:, :, 1, :C_out]
    N, T, _ = mean_ct.shape
    cg = C_out // groups
    mean_k = mean_ct.reshape(N, T, groups, cg)
    m2_k = m2_ct.reshape(N, T, groups, cg)
    mean_g = jnp.mean(mean_k, axis=(1, 3))                        # (N, G)
    dm = mean_k - mean_g[:, None, :, None]
    m2_g = jnp.sum(m2_k, axis=(1, 3)) + chunk_count * jnp.sum(dm * dm,
                                                              axis=(1, 3))
    var_g = m2_g / float(T * cg * chunk_count)
    inv_g = jax.lax.rsqrt(var_g + eps)
    inv_c = jnp.repeat(inv_g, cg, axis=1)                         # (N, C)
    mean_c = jnp.repeat(mean_g, cg, axis=1)
    scale = gamma[None, :] * inv_c
    shift = beta[None, :] - mean_c * scale
    return scale, shift


def prepare_conv_norm_params(weight, gamma, beta):
    """One-time (model-init) parameter prep — hoisted out of the hot path."""
    C_out, C_in, K, K2 = weight.shape
    assert K == K2 and K % 2 == 1 and K // 2 <= 1, "supports kernel_size 1 or 3"
    Cp = _round_up(C_out, 128)
    # Per-tap weight layout (K*K, C_in, C_out_pad), taps ordered (ky, kx).
    w = jnp.transpose(weight, (2, 3, 1, 0)).reshape(K * K, C_in, C_out)
    w = jnp.pad(w, ((0, 0), (0, 0), (0, Cp - C_out))).astype(jnp.bfloat16)
    return dict(w_taps=w,
                gamma=jnp.asarray(gamma, jnp.float32),
                beta=jnp.asarray(beta, jnp.float32),
                K=K, C_in=C_in, C_out=C_out, Cp=Cp)


def conv_norm_nhwc(x, params, *, groups=32, eps=1e-5, tile_rows=None,
                   out_dtype=jnp.bfloat16, inter_dtype=jnp.bfloat16):
    """ConvNorm forward (conv k∈{1,3}, pad k//2, no bias, then GroupNorm).

    x : (N, H, W, C_in), ideally already bf16 (no extra HBM cast then).
    Returns (N, H, W, C_out) in out_dtype (bf16 by default).
    """
    K, C_in, C_out, Cp = params["K"], params["C_in"], params["C_out"], params["Cp"]
    w = params["w_taps"]
    halo = K // 2
    N, H, W, Cx = x.shape
    assert Cx == C_in and C_out % groups == 0

    if x.dtype != jnp.bfloat16:
        # TODO(synk): keep SoloV2 activations bf16 end-to-end so this cast (a
        # full extra HBM round trip) never runs in production.
        x = x.astype(jnp.bfloat16)

    vmem_limit = _vmem_limit_bytes()
    inter_bytes = jnp.dtype(inter_dtype).itemsize
    if tile_rows is None:
        tile_rows = _pick_tile_rows(H, W, C_in, Cp, K, inter_bytes,
                                    int(vmem_limit * 0.6))
    TR = int(tile_rows)
    assert H % TR == 0, "tile_rows must divide H"
    assert (TR * W) % 8 == 0 or TR == H
    T = H // TR
    hb = max(halo, 1)

    conv_kernel = functools.partial(
        _conv_stats_kernel, K=K, TR=TR, W=W, C_in=C_in, n_tiles=T,
        inv_tile=1.0 / float(TR * W))

    # ---- pass 1: conv + per-tile stats ------------------------------------
    y, stats = pl.pallas_call(
        conv_kernel,
        out_shape=(jax.ShapeDtypeStruct((N, H * W, Cp), inter_dtype),
                   jax.ShapeDtypeStruct((N, T, 2, Cp), jnp.float32)),
        grid_spec=pltpu.PrefetchScalarGridSpec(
            num_scalar_prefetch=0,
            grid=(N, T),
            in_specs=[
                # 1-row top/bottom halos (clamped at the image edge; the
                # kernel zeroes them at the boundary tiles).
                pl.BlockSpec((1, hb, W, C_in),
                             lambda n, r: (n, jnp.maximum(r * TR - halo, 0),
                                           0, 0)),
                pl.BlockSpec((1, TR, W, C_in), lambda n, r: (n, r, 0, 0)),
                pl.BlockSpec((1, hb, W, C_in),
                             lambda n, r: (n, jnp.minimum(r * TR + TR, H - hb),
                                           0, 0)),
                # Per-tap weights, resident across all grid steps.
                pl.BlockSpec((K * K, C_in, Cp), lambda n, r: (0, 0, 0)),
            ],
            out_specs=(
                pl.BlockSpec((1, TR * W, Cp), lambda n, r: (n, r, 0)),
                pl.BlockSpec((1, 1, 2, Cp), lambda n, r: (n, r, 0, 0)),
            ),
            scratch_shapes=[
                pltpu.VMEM((TR + 2 * halo, W + 2 * halo, C_in), jnp.bfloat16)],
        ),
        compiler_params=pltpu.CompilerParams(
            dimension_semantics=("parallel", "parallel"),
            vmem_limit_bytes=vmem_limit),
    )(x, x, x, w)

    # ---- combine stats (tiny) and build per-sample scale/shift -------------
    scale, shift = _combine_groupnorm_stats(
        stats, params["gamma"], params["beta"], C_out, groups, float(eps),
        chunk_count=TR * W)
    scale = jnp.pad(scale, ((0, 0), (0, Cp - C_out)))[:, None, :]   # (N,1,Cp)
    shift = jnp.pad(shift, ((0, 0), (0, Cp - C_out)))[:, None, :]

    # ---- pass 2: normalize -------------------------------------------------
    out = pl.pallas_call(
        _norm_kernel,
        out_shape=jax.ShapeDtypeStruct((N, H * W, Cp), out_dtype),
        grid_spec=pltpu.PrefetchScalarGridSpec(
            num_scalar_prefetch=0,
            grid=(N, T),
            in_specs=[
                pl.BlockSpec((1, TR * W, Cp), lambda n, r: (n, r, 0)),
                pl.BlockSpec((1, 1, Cp), lambda n, r: (n, 0, 0)),
                pl.BlockSpec((1, 1, Cp), lambda n, r: (n, 0, 0)),
            ],
            out_specs=pl.BlockSpec((1, TR * W, Cp), lambda n, r: (n, r, 0)),
        ),
        compiler_params=pltpu.CompilerParams(
            dimension_semantics=("parallel", "parallel"),
            vmem_limit_bytes=vmem_limit),
    )(y, scale, shift)

    out = out.reshape(N, H, W, Cp)
    if Cp != C_out:
        out = out[..., :C_out]      # no-op for production C_out % 128 == 0
    return out


def conv_norm_nchw(x_nchw, params, **kw):
    # NCHW parity shim with the PyTorch ConvNorm; production SoloV2 should
    # stay NHWC end-to-end and call conv_norm_nhwc directly.
    out = conv_norm_nhwc(jnp.transpose(x_nchw, (0, 2, 3, 1)), params, **kw)
    return jnp.transpose(out, (0, 3, 1, 2))


def _reference_nchw(x, weight, gamma, beta, groups, eps=1e-5):
    # Pure-JAX reference (NCHW conv + GroupNorm), correctness check only.
    y = jax.lax.conv_general_dilated(
        x.astype(jnp.float32), weight.astype(jnp.float32),
        window_strides=(1, 1), padding="SAME",
        dimension_numbers=("NCHW", "OIHW", "NCHW"))
    N, C, H, W = y.shape
    yg = y.reshape(N, groups, (C // groups) * H * W)
    mean = jnp.mean(yg, axis=-1, keepdims=True)
    var = jnp.mean((yg - mean) ** 2, axis=-1, keepdims=True)
    yn = ((yg - mean) / jnp.sqrt(var + eps)).reshape(N, C, H, W)
    return yn * gamma[None, :, None, None] + beta[None, :, None, None]


if __name__ == "__main__":
    # Small shapes consistent with ConvNorm (GroupNorm default groups=32).
    N, C_in, C_out, H, W, G = 2, 4, 32, 16, 16, 32
    key = jax.random.PRNGKey(0)
    k3_key, k1_key = jax.random.split(key)

    def make_case(case_key, k):
        kx, kw, kg, kb = jax.random.split(case_key, 4)
        x = jax.random.normal(kx, (N, C_in, H, W), dtype=jnp.float32)
        w = 0.1 * jax.random.normal(kw, (C_out, C_in, k, k), dtype=jnp.float32)
        g = 1.0 + 0.1 * jax.random.normal(kg, (C_out,), dtype=jnp.float32)
        b = 0.05 * jax.random.normal(kb, (C_out,), dtype=jnp.float32)
        return x, w, g, b

    for k, case_key, tile_choices in ((3, k3_key, (4, None)), (1, k1_key, (8,))):
        x, weight, gamma, beta = make_case(case_key, k)
        params = prepare_conv_norm_params(weight, gamma, beta)   # hoisted prep

        # Production path: bf16 NHWC activations, no wrapper-side cast.
        x_nhwc = jnp.transpose(x, (0, 2, 3, 1)).astype(jnp.bfloat16)

        # Reference on identically bf16-rounded operands.
        x_r = jnp.transpose(x_nhwc.astype(jnp.float32), (0, 3, 1, 2))
        w_r = weight.astype(jnp.bfloat16).astype(jnp.float32)
        ref = _reference_nchw(x_r, w_r, gamma, beta, G)
        ref_nhwc = jnp.transpose(ref, (0, 2, 3, 1))

        for tr in tile_choices:   # explicit multi-tile path + auto tile picker
            out = conv_norm_nhwc(x_nhwc, params, groups=G, tile_rows=tr)
            out = jax.block_until_ready(out)
            assert out.shape == (N, H, W, C_out)
            err = float(jnp.max(jnp.abs(out.astype(jnp.float32) - ref_nhwc)))
            # Tolerance reflects bf16 intermediate + bf16 output precision.
            assert err < 6e-2, (k, tr, err)

    print("KERNEL_OK")
</pallas_src>

<mosaic_0001>
module attributes {stable_mosaic.version = 11 : i64} {
  func.func @_conv_stats_kernel(%arg0: i32, %arg1: i32, %arg2: memref<1x1x16x4xbf16, #tpu.memory_space<vmem>>, %arg3: memref<1x4x16x4xbf16, #tpu.memory_space<vmem>>, %arg4: memref<1x1x16x4xbf16, #tpu.memory_space<vmem>>, %arg5: memref<9x4x128xbf16, #tpu.memory_space<vmem>>, %arg6: memref<1x64x128xbf16, #tpu.memory_space<vmem>>, %arg7: memref<1x1x2x128xf32, #tpu.memory_space<vmem>>, %arg8: memref<6x18x4xbf16, #tpu.memory_space<vmem>>) attributes {dimension_semantics = [#tpu.dimension_semantics<parallel>, #tpu.dimension_semantics<parallel>], iteration_bounds = array<i64: 2, 4>, scalar_prefetch = 0 : i64, scratch_operands = 1 : i64, tpu.core_type = #tpu.core_type<tc>, window_params = [{transform_indices = @transform_0, window_bounds = array<i64: 1, 1, 16, 4>}, {transform_indices = @transform_1, window_bounds = array<i64: 1, 4, 16, 4>}, {transform_indices = @transform_2, window_bounds = array<i64: 1, 1, 16, 4>}, {pipeline_mode = #tpu.pipeline_mode<synchronous>, transform_indices = @transform_3, window_bounds = array<i64: 9, 4, 128>}, {transform_indices = @transform_4, window_bounds = array<i64: 1, 64, 128>}, {transform_indices = @transform_5, window_bounds = array<i64: 1, 1, 2, 128>}]} {
    %cst = arith.constant 0.000000e+00 : bf16
    %0 = vector.broadcast %cst : bf16 to vector<6x1x4xbf16>
    %c0 = arith.constant 0 : index
    %c0_0 = arith.constant 0 : index
    %c0_1 = arith.constant 0 : index
    %1 = vector.load %arg8[%c0, %c0_0, %c0_1] : memref<6x18x4xbf16, #tpu.memory_space<vmem>>, vector<6x1x4xbf16>
    tpu.vector_store %arg8[%c0, %c0_0, %c0_1], %0 {strides = array<i32>} : memref<6x18x4xbf16, #tpu.memory_space<vmem>>, vector<6x1x4xbf16>,
    %c0_2 = arith.constant 0 : index
    %c17 = arith.constant 17 : index
    %c0_3 = arith.constant 0 : index
    %2 = vector.load %arg8[%c0_2, %c17, %c0_3] : memref<6x18x4xbf16, #tpu.memory_space<vmem>>, vector<6x1x4xbf16>
    tpu.vector_store %arg8[%c0_2, %c17, %c0_3], %0 {strides = array<i32>} : memref<6x18x4xbf16, #tpu.memory_space<vmem>>, vector<6x1x4xbf16>,
    %c0_4 = arith.constant 0 : index
    %c0_5 = arith.constant 0 : index
    %c0_6 = arith.constant 0 : index
    %c0_7 = arith.constant 0 : index
    %3 = vector.load %arg3[%c0_4, %c0_5, %c0_6, %c0_7] : memref<1x4x16x4xbf16, #tpu.memory_space<vmem>>, vector<1x4x16x4xbf16>
    %4 = vector.shape_cast %3 : vector<1x4x16x4xbf16> to vector<4x16x4xbf16>
    %c1 = arith.constant 1 : index
    %c1_8 = arith.constant 1 : index
    %c0_9 = arith.constant 0 : index
    %5 = vector.load %arg8[%c1, %c1_8, %c0_9] : memref<6x18x4xbf16, #tpu.memory_space<vmem>>, vector<4x16x4xbf16>
    tpu.vector_store %arg8[%c1, %c1_8, %c0_9], %4 {strides = array<i32>} : memref<6x18x4xbf16, #tpu.memory_space<vmem>>, vector<4x16x4xbf16>,
    %c0_i32 = arith.constant 0 : i32
    %6 = arith.cmpi sgt, %arg1, %c0_i32 : i32
    %c0_10 = arith.constant 0 : index
    %c0_11 = arith.constant 0 : index
    %c0_12 = arith.constant 0 : index
    %c0_13 = arith.constant 0 : index
    %7 = vector.load %arg2[%c0_10, %c0_11, %c0_12, %c0_13] : memref<1x1x16x4xbf16, #tpu.memory_space<vmem>>, vector<1x1x16x4xbf16>
    %8 = vector.shape_cast %7 : vector<1x1x16x4xbf16> to vector<1x16x4xbf16>
    %cst_14 = arith.constant 0.000000e+00 : bf16
    %9 = vector.broadcast %cst_14 : bf16 to vector<1x16x4xbf16>
    %10 = arith.select %6, %8, %9 : vector<1x16x4xbf16>
    %c0_15 = arith.constant 0 : index
    %c1_16 = arith.constant 1 : index
    %c0_17 = arith.constant 0 : index
    %11 = vector.load %arg8[%c0_15, %c1_16, %c0_17] : memref<6x18x4xbf16, #tpu.memory_space<vmem>>, vector<1x16x4xbf16>
    tpu.vector_store %arg8[%c0_15, %c1_16, %c0_17], %10 {strides = array<i32>} : memref<6x18x4xbf16, #tpu.memory_space<vmem>>, vector<1x16x4xbf16>,
    %c3_i32 = arith.constant 3 : i32
    %12 = arith.cmpi slt, %arg1, %c3_i32 : i32
    %c0_18 = arith.constant 0 : index
    %c0_19 = arith.constant 0 : index
    %c0_20 = arith.constant 0 : index
    %c0_21 = arith.constant 0 : index
    %13 = vector.load %arg4[%c0_18, %c0_19, %c0_20, %c0_21] : memref<1x1x16x4xbf16, #tpu.memory_space<vmem>>, vector<1x1x16x4xbf16>
    %14 = vector.shape_cast %13 : vector<1x1x16x4xbf16> to vector<1x16x4xbf16>
    %cst_22 = arith.constant 0.000000e+00 : bf16
    %15 = vector.broadcast %cst_22 : bf16 to vector<1x16x4xbf16>
    %16 = arith.select %12, %14, %15 : vector<1x16x4xbf16>
    %c5 = arith.constant 5 : index
    %c1_23 = arith.constant 1 : index
    %c0_24 = arith.constant 0 : index
    %17 = vector.load %arg8[%c5, %c1_23, %c0_24] : memref<6x18x4xbf16, #tpu.memory_space<vmem>>, vector<1x16x4xbf16>
    tpu.vector_store %arg8[%c5, %c1_23, %c0_24], %16 {strides = array<i32>} : memref<6x18x4xbf16, #tpu.memory_space<vmem>>, vector<1x16x4xbf16>,
    %cst_25 = arith.constant 0.000000e+00 : f32
    %18 = vector.broadcast %cst_25 : f32 to vector<64x128xf32>
    %c0_26 = arith.constant 0 : index
    %c0_27 = arith.constant 0 : index
    %c0_28 = arith.constant 0 : index
    %19 = vector.load %arg8[%c0_26, %c0_27, %c0_28] : memref<6x18x4xbf16, #tpu.memory_space<vmem>>, vector<4x16x4xbf16>
    %20 = vector.shape_cast %19 : vector<4x16x4xbf16> to vector<64x4xbf16>
    %c0_29 = arith.constant 0 : index
    %c0_30 = arith.constant 0 : index
    %c0_31 = arith.constant 0 : index
    %21 = vector.load %arg5[%c0_29, %c0_30, %c0_31] : memref<9x4x128xbf16, #tpu.memory_space<vmem>>, vector<1x4x128xbf16>
    %22 = vector.shape_cast %21 : vector<1x4x128xbf16> to vector<4x128xbf16>
    %cst_32 = arith.constant dense<0.000000e+00> : vector<64x128xf32>
    %23 = tpu.matmul %20, %22, %cst_32 {dimension_numbers = #tpu.dot_dimension_numbers<[1], [0], [0], [1], [0, 0, 1, 1], [], []>} : vector<64x4xbf16>, vector<4x128xbf16>, vector<64x128xf32> -> vector<64x128xf32>
    %24 = arith.addf %18, %23 : vector<64x128xf32>
    %c0_33 = arith.constant 0 : index
    %c1_34 = arith.constant 1 : index
    %c0_35 = arith.constant 0 : index
    %25 = vector.load %arg8[%c0_33, %c1_34, %c0_35] : memref<6x18x4xbf16, #tpu.memory_space<vmem>>, vector<4x16x4xbf16>
    %26 = vector.shape_cast %25 : vector<4x16x4xbf16> to vector<64x4xbf16>
    %c1_36 = arith.constant 1 : index
    %c0_37 = arith.constant 0 : index
    %c0_38 = arith.constant 0 : index
    %27 = vector.load %arg5[%c1_36, %c0_37, %c0_38] : memref<9x4x128xbf16, #tpu.memory_space<vmem>>, vector<1x4x128xbf16>
    %28 = vector.shape_cast %27 : vector<1x4x128xbf16> to vector<4x128xbf16>
    %cst_39 = arith.constant dense<0.000000e+00> : vector<64x128xf32>
    %29 = tpu.matmul %26, %28, %cst_39 {dimension_numbers = #tpu.dot_dimension_numbers<[1], [0], [0], [1], [0, 0, 1, 1], [], []>} : vector<64x4xbf16>, vector<4x128xbf16>, vector<64x128xf32> -> vector<64x128xf32>
    %30 = arith.addf %24, %29 : vector<64x128xf32>
    %c0_40 = arith.constant 0 : index
    %c2 = arith.constant 2 : index
    %c0_41 = arith.constant 0 : index
    %31 = vector.load %arg8[%c0_40, %c2, %c0_41] : memref<6x18x4xbf16, #tpu.memory_space<vmem>>, vector<4x16x4xbf16>
    %32 = vector.shape_cast %31 : vector<4x16x4xbf16> to vector<64x4xbf16>
    %c2_42 = arith.constant 2 : index
    %c0_43 = arith.constant 0 : index
    %c0_44 = arith.constant 0 : index
    %33 = vector.load %arg5[%c2_42, %c0_43, %c0_44] : memref<9x4x128xbf16, #tpu.memory_space<vmem>>, vector<1x4x128xbf16>
    %34 = vector.shape_cast %33 : vector<1x4x128xbf16> to vector<4x128xbf16>
    %cst_45 = arith.constant dense<0.000000e+00> : vector<64x128xf32>
    %35 = tpu.matmul %32, %34, %cst_45 {dimension_numbers = #tpu.dot_dimension_numbers<[1], [0], [0], [1], [0, 0, 1, 1], [], []>} : vector<64x4xbf16>, vector<4x128xbf16>, vector<64x128xf32> -> vector<64x128xf32>
    %36 = arith.addf %30, %35 : vector<64x128xf32>
    %c1_46 = arith.constant 1 : index
    %c0_47 = arith.constant 0 : index
    %c0_48 = arith.constant 0 : index
    %37 = vector.load %arg8[%c1_46, %c0_47, %c0_48] : memref<6x18x4xbf16, #tpu.memory_space<vmem>>, vector<4x16x4xbf16>
    %38 = vector.shape_cast %37 : vector<4x16x4xbf16> to vector<64x4xbf16>
    %c3 = arith.constant 3 : index
    %c0_49 = arith.constant 0 : index
    %c0_50 = arith.constant 0 : index
    %39 = vector.load %arg5[%c3, %c0_49, %c0_50] : memref<9x4x128xbf16, #tpu.memory_space<vmem>>, vector<1x4x128xbf16>
    %40 = vector.shape_cast %39 : vector<1x4x128xbf16> to vector<4x128xbf16>
    %cst_51 = arith.constant dense<0.000000e+00> : vector<64x128xf32>
    %41 = tpu.matmul %38, %40, %cst_51 {dimension_numbers = #tpu.dot_dimension_numbers<[1], [0], [0], [1], [0, 0, 1, 1], [], []>} : vector<64x4xbf16>, vector<4x128xbf16>, vector<64x128xf32> -> vector<64x128xf32>
    %42 = arith.addf %36, %41 : vector<64x128xf32>
    %c1_52 = arith.constant 1 : index
    %c1_53 = arith.constant 1 : index
    %c0_54 = arith.constant 0 : index
    %43 = vector.load %arg8[%c1_52, %c1_53, %c0_54] : memref<6x18x4xbf16, #tpu.memory_space<vmem>>, vector<4x16x4xbf16>
    %44 = vector.shape_cast %43 : vector<4x16x4xbf16> to vector<64x4xbf16>
    %c4 = arith.constant 4 : index
    %c0_55 = arith.constant 0 : index
    %c0_56 = arith.constant 0 : index
    %45 = vector.load %arg5[%c4, %c0_55, %c0_56] : memref<9x4x128xbf16, #tpu.memory_space<vmem>>, vector<1x4x128xbf16>
    %46 = vector.shape_cast %45 : vector<1x4x128xbf16> to vector<4x128xbf16>
    %cst_57 = arith.constant dense<0.000000e+00> : vector<64x128xf32>
    %47 = tpu.matmul %44, %46, %cst_57 {dimension_numbers = #tpu.dot_dimension_numbers<[1], [0], [0], [1], [0, 0, 1, 1], [], []>} : vector<64x4xbf16>, vector<4x128xbf16>, vector<64x128xf32> -> vector<64x128xf32>
    %48 = arith.addf %42, %47 : vector<64x128xf32>
    %c1_58 = arith.constant 1 : index
    %c2_59 = arith.constant 2 : index
    %c0_60 = arith.constant 0 : index
    %49 = vector.load %arg8[%c1_58, %c2_59, %c0_60] : memref<6x18x4xbf16, #tpu.memory_space<vmem>>, vector<4x16x4xbf16>
    %50 = vector.shape_cast %49 : vector<4x16x4xbf16> to vector<64x4xbf16>
    %c5_61 = arith.constant 5 : index
    %c0_62 = arith.constant 0 : index
    %c0_63 = arith.constant 0 : index
    %51 = vector.load %arg5[%c5_61, %c0_62, %c0_63] : memref<9x4x128xbf16, #tpu.memory_space<vmem>>, vector<1x4x128xbf16>
    %52 = vector.shape_cast %51 : vector<1x4x128xbf16> to vector<4x128xbf16>
    %cst_64 = arith.constant dense<0.000000e+00> : vector<64x128xf32>
    %53 = tpu.matmul %50, %52, %cst_64 {dimension_numbers = #tpu.dot_dimension_numbers<[1], [0], [0], [1], [0, 0, 1, 1], [], []>} : vector<64x4xbf16>, vector<4x128xbf16>, vector<64x128xf32> -> vector<64x128xf32>
    %54 = arith.addf %48, %53 : vector<64x128xf32>
    %c2_65 = arith.constant 2 : index
    %c0_66 = arith.constant 0 : index
    %c0_67 = arith.constant 0 : index
    %55 = vector.load %arg8[%c2_65, %c0_66, %c0_67] : memref<6x18x4xbf16, #tpu.memory_space<vmem>>, vector<4x16x4xbf16>
    %56 = vector.shape_cast %55 : vector<4x16x4xbf16> to vector<64x4xbf16>
    %c6 = arith.constant 6 : index
    %c0_68 = arith.constant 0 : index
    %c0_69 = arith.constant 0 : index
    %57 = vector.load %arg5[%c6, %c0_68, %c0_69] : memref<9x4x128xbf16, #tpu.memory_space<vmem>>, vector<1x4x128xbf16>
    %58 = vector.shape_cast %57 : vector<1x4x128xbf16> to vector<4x128xbf16>
    %cst_70 = arith.constant dense<0.000000e+00> : vector<64x128xf32>
    %59 = tpu.matmul %56, %58, %cst_70 {dimension_numbers = #tpu.dot_dimension_numbers<[1], [0], [0], [1], [0, 0, 1, 1], [], []>} : vector<64x4xbf16>, vector<4x128xbf16>, vector<64x128xf32> -> vector<64x128xf32>
    %60 = arith.addf %54, %59 : vector<64x128xf32>
    %c2_71 = arith.constant 2 : index
    %c1_72 = arith.constant 1 : index
    %c0_73 = arith.constant 0 : index
    %61 = vector.load %arg8[%c2_71, %c1_72, %c0_73] : memref<6x18x4xbf16, #tpu.memory_space<vmem>>, vector<4x16x4xbf16>
    %62 = vector.shape_cast %61 : vector<4x16x4xbf16> to vector<64x4xbf16>
    %c7 = arith.constant 7 : index
    %c0_74 = arith.constant 0 : index
    %c0_75 = arith.constant 0 : index
    %63 = vector.load %arg5[%c7, %c0_74, %c0_75] : memref<9x4x128xbf16, #tpu.memory_space<vmem>>, vector<1x4x128xbf16>
    %64 = vector.shape_cast %63 : vector<1x4x128xbf16> to vector<4x128xbf16>
    %cst_76 = arith.constant dense<0.000000e+00> : vector<64x128xf32>
    %65 = tpu.matmul %62, %64, %cst_76 {dimension_numbers = #tpu.dot_dimension_numbers<[1], [0], [0], [1], [0, 0, 1, 1], [], []>} : vector<64x4xbf16>, vector<4x128xbf16>, vector<64x128xf32> -> vector<64x128xf32>
    %66 = arith.addf %60, %65 : vector<64x128xf32>
    %c2_77 = arith.constant 2 : index
    %c2_78 = arith.constant 2 : index
    %c0_79 = arith.constant 0 : index
    %67 = vector.load %arg8[%c2_77, %c2_78, %c0_79] : memref<6x18x4xbf16, #tpu.memory_space<vmem>>, vector<4x16x4xbf16>
    %68 = vector.shape_cast %67 : vector<4x16x4xbf16> to vector<64x4xbf16>
    %c8 = arith.constant 8 : index
    %c0_80 = arith.constant 0 : index
    %c0_81 = arith.constant 0 : index
    %69 = vector.load %arg5[%c8, %c0_80, %c0_81] : memref<9x4x128xbf16, #tpu.memory_space<vmem>>, vector<1x4x128xbf16>
    %70 = vector.shape_cast %69 : vector<1x4x128xbf16> to vector<4x128xbf16>
    %cst_82 = arith.constant dense<0.000000e+00> : vector<64x128xf32>
    %71 = tpu.matmul %68, %70, %cst_82 {dimension_numbers = #tpu.dot_dimension_numbers<[1], [0], [0], [1], [0, 0, 1, 1], [], []>} : vector<64x4xbf16>, vector<4x128xbf16>, vector<64x128xf32> -> vector<64x128xf32>
    %72 = arith.addf %66, %71 : vector<64x128xf32>
    %cst_83 = arith.constant dense<0.000000e+00> : vector<128xf32>
    %73 = vector.multi_reduction <add>, %72, %cst_83 [0] : vector<64x128xf32> to vector<128xf32>
    %74 = vector.shape_cast %73 : vector<128xf32> to vector<1x128xf32>
    %cst_84 = arith.constant 1.562500e-02 : f32
    %75 = vector.broadcast %cst_84 : f32 to vector<1x128xf32>
    %76 = arith.mulf %74, %75 : vector<1x128xf32>
    %77 = vector.broadcast %76 : vector<1x128xf32> to vector<64x128xf32>
    %78 = arith.subf %72, %77 : vector<64x128xf32>
    %79 = arith.mulf %78, %78 : vector<64x128xf32>
    %cst_85 = arith.constant dense<0.000000e+00> : vector<128xf32>
    %80 = vector.multi_reduction <add>, %79, %cst_85 [0] : vector<64x128xf32> to vector<128xf32>
    %81 = vector.shape_cast %80 : vector<128xf32> to vector<1x128xf32>
    %c0_86 = arith.constant 0 : index
    %c0_87 = arith.constant 0 : index
    %c0_88 = arith.constant 0 : index
    %c0_89 = arith.constant 0 : index
    %82 = vector.load %arg7[%c0_86, %c0_87, %c0_88, %c0_89] : memref<1x1x2x128xf32, #tpu.memory_space<vmem>>, vector<1x1x1x128xf32>
    %83 = vector.shape_cast %82 : vector<1x1x1x128xf32> to vector<1x128xf32>
    %84 = vector.shape_cast %76 : vector<1x128xf32> to vector<1x1x1x128xf32>
    tpu.vector_store %arg7[%c0_86, %c0_87, %c0_88, %c0_89], %84 {strides = array<i32>} : memref<1x1x2x128xf32, #tpu.memory_space<vmem>>, vector<1x1x1x128xf32>,
    %c0_90 = arith.constant 0 : index
    %c0_91 = arith.constant 0 : index
    %c1_92 = arith.constant 1 : index
    %c0_93 = arith.constant 0 : index
    %85 = vector.load %arg7[%c0_90, %c0_91, %c1_92, %c0_93] : memref<1x1x2x128xf32, #tpu.memory_space<vmem>>, vector<1x1x1x128xf32>
    %86 = vector.shape_cast %85 : vector<1x1x1x128xf32> to vector<1x128xf32>
    %87 = vector.shape_cast %81 : vector<1x128xf32> to vector<1x1x1x128xf32>
    tpu.vector_store %arg7[%c0_90, %c0_91, %c1_92, %c0_93], %87 {strides = array<i32>} : memref<1x1x2x128xf32, #tpu.memory_space<vmem>>, vector<1x1x1x128xf32>,
    %88 = vector.shape_cast %72 : vector<64x128xf32> to vector<1x64x128xf32>
    %89 = arith.truncf %88 : vector<1x64x128xf32> to vector<1x64x128xbf16>
    %c0_94 = arith.constant 0 : index
    %c0_95 = arith.constant 0 : index
    %c0_96 = arith.constant 0 : index
    %90 = vector.load %arg6[%c0_94, %c0_95, %c0_96] : memref<1x64x128xbf16, #tpu.memory_space<vmem>>, vector<1x64x128xbf16>
    tpu.vector_store %arg6[%c0_94, %c0_95, %c0_96], %89 {strides = array<i32>} : memref<1x64x128xbf16, #tpu.memory_space<vmem>>, vector<1x64x128xbf16>,
    return
  }
  func.func @transform_0(%arg0: i32, %arg1: i32) -> (i32, i32, i32, i32) {
    %c4_i32 = arith.constant 4 : i32
    %0 = arith.muli %arg1, %c4_i32 : i32
    %c1_i32 = arith.constant 1 : i32
    %1 = arith.subi %0, %c1_i32 : i32
    %c0_i32 = arith.constant 0 : i32
    %2 = arith.maxsi %1, %c0_i32 : i32
    %c0_i32_0 = arith.constant 0 : i32
    %c0_i32_1 = arith.constant 0 : i32
    %c0_i32_2 = arith.constant 0 : i32
    return %arg0, %2, %c0_i32_0, %c0_i32_1 : i32, i32, i32, i32
  }
  func.func @transform_1(%arg0: i32, %arg1: i32) -> (i32, i32, i32, i32) {
    %c0_i32 = arith.constant 0 : i32
    %c0_i32_0 = arith.constant 0 : i32
    %c0_i32_1 = arith.constant 0 : i32
    return %arg0, %arg1, %c0_i32, %c0_i32_0 : i32, i32, i32, i32
  }
  func.func @transform_2(%arg0: i32, %arg1: i32) -> (i32, i32, i32, i32) {
    %c4_i32 = arith.constant 4 : i32
    %0 = arith.muli %arg1, %c4_i32 : i32
    %c4_i32_0 = arith.constant 4 : i32
    %1 = arith.addi %0, %c4_i32_0 : i32
    %c15_i32 = arith.constant 15 : i32
    %2 = arith.minsi %1, %c15_i32 : i32
    %c0_i32 = arith.constant 0 : i32
    %c0_i32_1 = arith.constant 0 : i32
    %c0_i32_2 = arith.constant 0 : i32
    return %arg0, %2, %c0_i32, %c0_i32_1 : i32, i32, i32, i32
  }
  func.func @transform_3(%arg0: i32, %arg1: i32) -> (i32, i32, i32) {
    %c0_i32 = arith.constant 0 : i32
    %c0_i32_0 = arith.constant 0 : i32
    %c0_i32_1 = arith.constant 0 : i32
    %c0_i32_2 = arith.constant 0 : i32
    return %c0_i32, %c0_i32_0, %c0_i32_1 : i32, i32, i32
  }
  func.func @transform_4(%arg0: i32, %arg1: i32) -> (i32, i32, i32) {
    %c0_i32 = arith.constant 0 : i32
    %c0_i32_0 = arith.constant 0 : i32
    return %arg0, %arg1, %c0_i32 : i32, i32, i32
  }
  func.func @transform_5(%arg0: i32, %arg1: i32) -> (i32, i32, i32, i32) {
    %c0_i32 = arith.constant 0 : i32
    %c0_i32_0 = arith.constant 0 : i32
    %c0_i32_1 = arith.constant 0 : i32
    return %arg0, %arg1, %c0_i32, %c0_i32_0 : i32, i32, i32, i32
  }
}

</mosaic_0001>

<llo_original>
// kernel: tpu_custom_call.1
$region0: #{tpu_custom_call.1}
  #allocation0 [shape = 'u32[]', space=smem, size = 0x4, offset = 0x4, fixed_abs, tag = 'smem constant byte address 0x4 - core index']
  #allocation1 [shape = 'u32[144,128]{1,0:T(1,128)}', space=vmem, size = 0x12000, scoped, tag = 'internal scratch']
  #allocation2 [shape = 'bf16[6,18,4]{2,1,0:T(8,128)(2,1)}', space=vmem, size = 0x9000, scoped, tag = 'scratch operand']
  %s0 = inlined_call_operand.vmem [shape: bf16[2,16,16,4], index: 0, kind: input, shape index: {}]
  %s1 = inlined_call_operand.vmem [shape: bf16[2,16,16,4], index: 1, kind: input, shape index: {}]
  %s2 = inlined_call_operand.vmem [shape: bf16[2,16,16,4], index: 2, kind: input, shape index: {}]
  %s3 = inlined_call_operand.vmem [shape: bf16[9,4,128], index: 3, kind: input, shape index: {}]
  %s4 = inlined_call_operand.hbm [shape: bf16[2,256,128], index: 4, kind: output, shape index: {0}]
  %s5 = inlined_call_operand.hbm [shape: f32[2,4,2,128], index: 5, kind: output, shape index: {1}]
  %6 = xla_tuple %s4, %s5
  %s7 = sld [smem:[#allocation0]]
  $region57: #{tpu_custom_call.1} parent=0
    _
  %s9 = ssub.s32 1, %s7
  %s10 = scalar_select 0, %s9, %s7
  $region1: #{tpu_custom_call.1} parent=0
    #allocation3 [shape = 'u8[32768]{0}', space=vmem, size = 0x8000, scoped, tag = 'output window, operand 0']
    #allocation4 [shape = 's32[2]{0}', space=sflag, size = 0x8, scoped, tag = 'scoped memory for tpu_custom_call.1']
    #allocation5 [shape = 'u8[2048]{0}', space=vmem, size = 0x800, scoped, tag = 'output window, operand 1']
    #allocation6 [shape = 's32[2]{0}', space=sflag, size = 0x8, scoped, tag = 'scoped memory for tpu_custom_call.1']
    %11 = vsyncpa [#allocation4], 0
    %s12 = scalar_lea.sflag [#allocation4], 1
    %13 = vsyncpa %s12, 0
    %14 = vsyncpa [#allocation6], 0
    %s15 = scalar_lea.sflag [#allocation6], 1
    %16 = vsyncpa %s15, 0
    loop: start=0, step=1, limit=10
    $region2: #{tpu_custom_call.1} parent=1 // loop_pre_header
      _
    $region3: #{tpu_custom_call.1} parent=1 // loop_header
      %s18 = sphi 0, %s22
      %p19 = scmp.ge.s32.totalorder %s18, 10
      %s25 = sphi 0, %s37
      %s26 = sphi 0, %s33
      %s27 = sphi 0, %s25
      %s28 = sphi 0, %s26
      %s29 = sphi 0, %s27
      %s30 = sphi 0, %s28
      %s50 = sphi 0, %s52
      %s53 = sphi 0, %s50
      %s54 = sphi 0, %s53
      %s70 = sphi 0, %s54
      %s78 = sphi 0, %s80
      %s81 = sphi 0, %s78
      %s82 = sphi 0, %s81
      %s98 = sphi 0, %s82
      %s114 = sphi 0, %s116
      %s117 = sphi 0, %s114
      %s118 = sphi 0, %s117
      %s134 = sphi 0, %s118
      %s138 = sphi 0, %s138
      %s140 = sphi 0, %s138
      %s141 = sphi 0, %s140
      %s155 = sphi 0, %s141
      %s163 = sphi 0, %s165
      %s166 = sphi 0, %s163
      %s167 = sphi 0, %s166
      %s183 = sphi 0, %s167
      %s191 = sphi 0, %s193
      %s194 = sphi 0, %s191
      %s195 = sphi 0, %s194
      %s211 = sphi 0, %s195
    $region4: #{tpu_custom_call.1} parent=1 // loop_header_branch
      %21 = sbr.rel (%p19) target = $region8
    $region5: #{tpu_custom_call.1} parent=1 // loop_body
      %s23 = ssub.s32 %s18, 1
      %s24 = ssub.s32 %s18, 2
      %s31 = sadd.s32 1, %s26
      %p32 = scmp.ge.s32.totalorder %s31, 4
      %s33 = scalar_select %p32, 0, %s31
      %s34 = sadd.s32 1, %s25
      %s35 = scalar_select %p32, %s34, %s25
      %p36 = scmp.ge.s32.totalorder %s35, 2
      %s37 = scalar_select %p36, 0, %s35
      %s38 = smul.u32 %s26, 4
      %s39 = ssub.s32 %s38, 1
      %p40 = scmp.gt.s32.totalorder %s39, 0
      %s41 = scalar_select %p40, %s39, 0
      %s42 = smul.u32 %s33, 4
      %s43 = ssub.s32 %s42, 1
      %p44 = scmp.gt.s32.totalorder %s43, 0
      %s45 = scalar_select %p44, %s43, 0
      %s46 = ssub.s32 %s25, %s37
      %s47 = ssub.s32 %s41, %s45
      %s48 = sor.u32 %s46, %s47
      %p49 = scmp.eq.s32.totalorder %s48, 0
      %s51 = sadd.s32 %s50, 1
      %s52 = scalar_select %p49, %s50, %s51
      %p55 = pneg %p49
      %p56 = scmp.eq.s32.totalorder %s18, 7
      %p57 = por %p55, %p56
      %p58 = scmp.ne.s32.totalorder %s50, %s53
      %p59 = scmp.eq.s32.totalorder %s18, 0
      %p60 = por %p58, %p59
      %p61 = scmp.ne.s32.totalorder %s50, %s53
      %p62 = scmp.eq.s32.totalorder %s23, 7
      %p63 = por %p61, %p62
      %p64 = scmp.ne.s32.totalorder %s53, %s54
      %p65 = scmp.eq.s32.totalorder %s23, 0
      %p66 = por %p64, %p65
      %p67 = scmp.ne.s32.totalorder %s53, %s54
      %p68 = scmp.eq.s32.totalorder %s24, 7
      %p69 = por %p67, %p68
      %p71 = scmp.ne.s32.totalorder %s54, %s70
      %p72 = scmp.eq.s32.totalorder %s24, 0
      %p73 = por %p71, %p72
      %s74 = ssub.s32 %s25, %s37
      %s75 = ssub.s32 %s26, %s33
      %s76 = sor.u32 %s74, %s75
      %p77 = scmp.eq.s32.totalorder %s76, 0
      %s79 = sadd.s32 %s78, 1
      %s80 = scalar_select %p77, %s78, %s79
      %p83 = pneg %p77
      %p84 = scmp.eq.s32.totalorder %s18, 7
      %p85 = por %p83, %p84
      %p86 = scmp.ne.s32.totalorder %s78, %s81
      %p87 = scmp.eq.s32.totalorder %s18, 0
      %p88 = por %p86, %p87
      %p89 = scmp.ne.s32.totalorder %s78, %s81
      %p90 = scmp.eq.s32.totalorder %s23, 7
      %p91 = por %p89, %p90
      %p92 = scmp.ne.s32.totalorder %s81, %s82
      %p93 = scmp.eq.s32.totalorder %s23, 0
      %p94 = por %p92, %p93
      %p95 = scmp.ne.s32.totalorder %s81, %s82
      %p96 = scmp.eq.s32.totalorder %s24, 7
      %p97 = por %p95, %p96
      %p99 = scmp.ne.s32.totalorder %s82, %s98
      %p100 = scmp.eq.s32.totalorder %s24, 0
      %p101 = por %p99, %p100
      %s102 = smul.u32 %s26, 4
      %s103 = sadd.s32 %s102, 4
      %p104 = scmp.lt.s32.totalorder %s103, 15
      %s105 = scalar_select %p104, %s103, 15
      %s106 = smul.u32 %s33, 4
      %s107 = sadd.s32 %s106, 4
      %p108 = scmp.lt.s32.totalorder %s107, 15
      %s109 = scalar_select %p108, %s107, 15
      %s110 = ssub.s32 %s25, %s37
      %s111 = ssub.s32 %s105, %s109
      %s112 = sor.u32 %s110, %s111
      %p113 = scmp.eq.s32.totalorder %s112, 0
      %s115 = sadd.s32 %s114, 1
      %s116 = scalar_select %p113, %s114, %s115
      %p119 = pneg %p113
      %p120 = scmp.eq.s32.totalorder %s18, 7
      %p121 = por %p119, %p120
      %p122 = scmp.ne.s32.totalorder %s114, %s117
      %p123 = scmp.eq.s32.totalorder %s18, 0
      %p124 = por %p122, %p123
      %p125 = scmp.ne.s32.totalorder %s114, %s117
      %p126 = scmp.eq.s32.totalorder %s23, 7
      %p127 = por %p125, %p126
      %p128 = scmp.ne.s32.totalorder %s117, %s118
      %p129 = scmp.eq.s32.totalorder %s23, 0
      %p130 = por %p128, %p129
      %p131 = scmp.ne.s32.totalorder %s117, %s118
      %p132 = scmp.eq.s32.totalorder %s24, 7
      %p133 = por %p131, %p132
      %p135 = scmp.ne.s32.totalorder %s118, %s134
      %p136 = scmp.eq.s32.totalorder %s24, 0
      %p137 = por %p135, %p136
      %s139 = sadd.s32 %s138, 1
      %p142 = scmp.eq.s32.totalorder %s18, 7
      %p143 = scmp.ne.s32.totalorder %s138, %s140
      %p144 = scmp.eq.s32.totalorder %s18, 0
      %p145 = por %p143, %p144
      %p146 = scmp.ne.s32.totalorder %s138, %s140
      %p147 = scmp.eq.s32.totalorder %s23, 7
      %p148 = por %p146, %p147
      %p149 = scmp.ne.s32.totalorder %s140, %s141
      %p150 = scmp.eq.s32.totalorder %s23, 0
      %p151 = por %p149, %p150
      %p152 = scmp.ne.s32.totalorder %s140, %s141
      %p153 = scmp.eq.s32.totalorder %s24, 7
      %p154 = por %p152, %p153
      %p156 = scmp.ne.s32.totalorder %s141, %s155
      %p157 = scmp.eq.s32.totalorder %s24, 0
      %p158 = por %p156, %p157
      %s159 = ssub.s32 %s25, %s37
      %s160 = ssub.s32 %s26, %s33
      %s161 = sor.u32 %s159, %s160
      %p162 = scmp.eq.s32.totalorder %s161, 0
      %s164 = sadd.s32 %s163, 1
      %s165 = scalar_select %p162, %s163, %s164
      %p168 = pneg %p162
      %p169 = scmp.eq.s32.totalorder %s18, 7
      %p170 = por %p168, %p169
      %p171 = scmp.ne.s32.totalorder %s163, %s166
      %p172 = scmp.eq.s32.totalorder %s18, 0
      %p173 = por %p171, %p172
      %p174 = scmp.ne.s32.totalorder %s163, %s166
      %p175 = scmp.eq.s32.totalorder %s23, 7
      %p176 = por %p174, %p175
      %p177 = scmp.ne.s32.totalorder %s166, %s167
      %p178 = scmp.eq.s32.totalorder %s23, 0
      %p179 = por %p177, %p178
      %p180 = scmp.ne.s32.totalorder %s166, %s167
      %p181 = scmp.eq.s32.totalorder %s24, 7
      %p182 = por %p180, %p181
      %p184 = scmp.ne.s32.totalorder %s167, %s183
      %p185 = scmp.eq.s32.totalorder %s24, 0
      %p186 = por %p184, %p185
      %s187 = ssub.s32 %s25, %s37
      %s188 = ssub.s32 %s26, %s33
      %s189 = sor.u32 %s187, %s188
      %p190 = scmp.eq.s32.totalorder %s189, 0
      %s192 = sadd.s32 %s191, 1
      %s193 = scalar_select %p190, %s191, %s192
      %p196 = pneg %p190
      %p197 = scmp.eq.s32.totalorder %s18, 7
      %p198 = por %p196, %p197
      %p199 = scmp.ne.s32.totalorder %s191, %s194
      %p200 = scmp.eq.s32.totalorder %s18, 0
      %p201 = por %p199, %p200
      %p202 = scmp.ne.s32.totalorder %s191, %s194
      %p203 = scmp.eq.s32.totalorder %s23, 7
      %p204 = por %p202, %p203
      %p205 = scmp.ne.s32.totalorder %s194, %s195
      %p206 = scmp.eq.s32.totalorder %s23, 0
      %p207 = por %p205, %p206
      %p208 = scmp.ne.s32.totalorder %s194, %s195
      %p209 = scmp.eq.s32.totalorder %s24, 7
      %p210 = por %p208, %p209
      %p212 = scmp.ne.s32.totalorder %s195, %s211
      %p213 = scmp.eq.s32.totalorder %s24, 0
      %p214 = por %p212, %p213
      %p215 = scmp.le.s32.totalorder 1, %s18
      %p216 = scmp.lt.s32.totalorder %s18, 9
      %p217 = pnand %p215, %p216
      %p218 = pneg %p217
      // Predicated region
      $region9: #{tpu_custom_call.1} parent=5 // pred_check
        _
      $region10: #{tpu_custom_call.1} parent=5 // pred_check_branch
        %220 = sbr.rel (%p217) target = $region12
      $region11: #{tpu_custom_call.1} parent=5 // pred_region
        %s221 = ssub.s32 %s18, 1
        // Predicated region
        $region13: #{tpu_custom_call.1} parent=11 // pred_check
          %p222 = pneg %p151
        $region14: #{tpu_custom_call.1} parent=11 // pred_check_branch
          %224 = sbr.rel (%p222) target = $region16
        $region15: #{tpu_custom_call.1} parent=11 // pred_region
          _
        $region16: #{tpu_custom_call.1} parent=11 // pred_fallthru
          _
      $region12: #{tpu_custom_call.1} parent=5 // pred_fallthru
        _
      %p225 = scmp.lt.s32.totalorder %s18, 8
      // Predicated region
      $region17: #{tpu_custom_call.1} parent=5 // pred_check
        %p226 = pneg %p225
      $region18: #{tpu_custom_call.1} parent=5 // pred_check_branch
        %228 = sbr.rel (%p226) target = $region20
      $region19: #{tpu_custom_call.1} parent=5 // pred_region
        // Predicated region
        $region21: #{tpu_custom_call.1} parent=19 // pred_check
          %p229 = pneg %p60
        $region22: #{tpu_custom_call.1} parent=19 // pred_check_branch
          %231 = sbr.rel (%p229) target = $region24
        $region23: #{tpu_custom_call.1} parent=19 // pred_region
          %s232 = smul.u32 %s26, 4
          %s233 = ssub.s32 %s232, 1
          %p234 = scmp.gt.s32.totalorder %s233, 0
          %s235 = scalar_select %p234, %s233, 0
          %p236 = scmp.lt.s32.totalorder %s25, 1
          %s237 = scalar_select %p236, %s25, 1
          %p238 = scmp.lt.s32.totalorder %s235, 15
          %s239 = scalar_select %p238, %s235, 15
          %s240 = smul.addr %s239, 2
          %s241 = smul.addr %s237, 32
          %s242 = sadd.s32 %s240, %s241
          %s243 = smul.addr %s242, 4
          %s244 = scalar_lea.vmem %s0, %s243
          %s245 = smul.u32 %s26, 4
          %s246 = ssub.s32 %s245, 1
          %p247 = scmp.gt.s32.totalorder %s246, 0
          %s248 = scalar_select %p247, %s246, 0
        $region24: #{tpu_custom_call.1} parent=19 // pred_fallthru
          _
        // Predicated region
        $region25: #{tpu_custom_call.1} parent=19 // pred_check
          %p249 = pneg %p88
        $region26: #{tpu_custom_call.1} parent=19 // pred_check_branch
          %251 = sbr.rel (%p249) target = $region28
        $region27: #{tpu_custom_call.1} parent=19 // pred_region
          %s252 = smul.u32 4, %s26
          %p253 = scmp.lt.s32.totalorder %s25, 1
          %s254 = scalar_select %p253, %s25, 1
          %p255 = scmp.lt.s32.totalorder %s252, 15
          %s256 = scalar_select %p255, %s252, 15
          %s257 = smul.addr %s256, 2
          %s258 = smul.addr %s254, 32
          %s259 = sadd.s32 %s257, %s258
          %s260 = smul.addr %s259, 4
          %s261 = scalar_lea.vmem %s1, %s260
          %s262 = smul.u32 4, %s26
        $region28: #{tpu_custom_call.1} parent=19 // pred_fallthru
          _
        // Predicated region
        $region29: #{tpu_custom_call.1} parent=19 // pred_check
          %p263 = pneg %p124
        $region30: #{tpu_custom_call.1} parent=19 // pred_check_branch
          %265 = sbr.rel (%p263) target = $region32
        $region31: #{tpu_custom_call.1} parent=19 // pred_region
          %s266 = smul.u32 %s26, 4
          %s267 = sadd.s32 %s266, 4
          %p268 = scmp.lt.s32.totalorder %s267, 15
          %s269 = scalar_select %p268, %s267, 15
          %p270 = scmp.lt.s32.totalorder %s25, 1
          %s271 = scalar_select %p270, %s25, 1
          %p272 = scmp.lt.s32.totalorder %s269, 15
          %s273 = scalar_select %p272, %s269, 15
          %s274 = smul.addr %s273, 2
          %s275 = smul.addr %s271, 32
          %s276 = sadd.s32 %s274, %s275
          %s277 = smul.addr %s276, 4
          %s278 = scalar_lea.vmem %s2, %s277
          %s279 = smul.u32 %s26, 4
          %s280 = sadd.s32 %s279, 4
          %p281 = scmp.lt.s32.totalorder %s280, 15
          %s282 = scalar_select %p281, %s280, 15
        $region32: #{tpu_custom_call.1} parent=19 // pred_fallthru
          _
      $region20: #{tpu_custom_call.1} parent=5 // pred_fallthru
        _
      %p283 = scmp.le.s32.totalorder 1, %s18
      %p284 = scmp.lt.s32.totalorder %s18, 9
      %p285 = pnand %p283, %p284
      %p286 = pneg %p285
      // Predicated region
      $region33: #{tpu_custom_call.1} parent=5 // pred_check
        _
      $region34: #{tpu_custom_call.1} parent=5 // pred_check_branch
        %288 = sbr.rel (%p285) target = $region36
      $region35: #{tpu_custom_call.1} parent=5 // pred_region
        %s289 = ssub.s32 %s18, 1
        %s290 = smul.u32 %s28, 4
        %s291 = ssub.s32 %s290, 1
        %p292 = scmp.gt.s32.totalorder %s291, 0
        %s293 = scalar_select %p292, %s291, 0
        %p294 = scmp.lt.s32.totalorder %s27, 1
        %s295 = scalar_select %p294, %s27, 1
        %p296 = scmp.lt.s32.totalorder %s293, 15
        %s297 = scalar_select %p296, %s293, 15
        %s298 = smul.addr %s297, 2
        %s299 = smul.addr %s295, 32
        %s300 = sadd.s32 %s298, %s299
        %s301 = smul.addr %s300, 4
        %s302 = scalar_lea.vmem %s0, %s301
        %p303 = pneg %p66
        %p304 = pneg %p63
        %s305 = smul.u32 4, %s28
        %p306 = scmp.lt.s32.totalorder %s27, 1
        %s307 = scalar_select %p306, %s27, 1
        %p308 = scmp.lt.s32.totalorder %s305, 15
        %s309 = scalar_select %p308, %s305, 15
        %s310 = smul.addr %s309, 2
        %s311 = smul.addr %s307, 32
        %s312 = sadd.s32 %s310, %s311
        %s313 = smul.addr %s312, 4
        %s314 = scalar_lea.vmem %s1, %s313
        %p315 = pneg %p94
        %p316 = pneg %p91
        %s317 = smul.u32 %s28, 4
        %s318 = sadd.s32 %s317, 4
        %p319 = scmp.lt.s32.totalorder %s318, 15
        %s320 = scalar_select %p319, %s318, 15
        %p321 = scmp.lt.s32.totalorder %s27, 1
        %s322 = scalar_select %p321, %s27, 1
        %p323 = scmp.lt.s32.totalorder %s320, 15
        %s324 = scalar_select %p323, %s320, 15
        %s325 = smul.addr %s324, 2
        %s326 = smul.addr %s322, 32
        %s327 = sadd.s32 %s325, %s326
        %s328 = smul.addr %s327, 4
        %s329 = scalar_lea.vmem %s2, %s328
        %p330 = pneg %p130
        %p331 = pneg %p127
        %p332 = pneg %p151
        %p333 = pneg %p148
        %p334 = pneg %p179
        %p335 = pneg %p176
        %s336 = sand.u32 %s166, 1
        %s337 = scalar_lea.sflag [#allocation4], %s336
        %s338 = sand.u32 %s166, 1
        %s339 = smul.addr %s338, 32
        %s340 = scalar_lea.vmem [#allocation3], %s339
        %p341 = pneg %p207
        %p342 = pneg %p204
        %s343 = sand.u32 %s194, 1
        %s344 = scalar_lea.sflag [#allocation6], %s343
        %s345 = sand.u32 %s194, 1
        %s346 = smul.addr %s345, 2
        %s347 = scalar_lea.vmem [#allocation5], %s346
        %s348 = smul.u32 %s28, 4
        %s349 = ssub.s32 %s348, 1
        %p350 = scmp.gt.s32.totalorder %s349, 0
        %s351 = scalar_select %p350, %s349, 0
        %p352 = scmp.lt.s32.totalorder %s27, 1
        %s353 = scalar_select %p352, %s27, 1
        %p354 = scmp.lt.s32.totalorder %s351, 15
        %s355 = scalar_select %p354, %s351, 15
        %s356 = smul.addr %s355, 2
        %s357 = smul.addr %s353, 32
        %s358 = sadd.s32 %s356, %s357
        %s359 = smul.addr %s358, 4
        %s360 = scalar_lea.vmem %s0, %s359
        %s361 = smul.u32 %s28, 4
        %s362 = ssub.s32 %s361, 1
        %p363 = scmp.gt.s32.totalorder %s362, 0
        %s364 = scalar_select %p363, %s362, 0
        %s365 = smul.u32 4, %s28
        %p366 = scmp.lt.s32.totalorder %s27, 1
        %s367 = scalar_select %p366, %s27, 1
        %p368 = scmp.lt.s32.totalorder %s365, 15
        %s369 = scalar_select %p368, %s365, 15
        %s370 = smul.addr %s369, 2
        %s371 = smul.addr %s367, 32
        %s372 = sadd.s32 %s370, %s371
        %s373 = smul.addr %s372, 4
        %s374 = scalar_lea.vmem %s1, %s373
        %s375 = smul.u32 4, %s28
        %s376 = smul.u32 %s28, 4
        %s377 = sadd.s32 %s376, 4
        %p378 = scmp.lt.s32.totalorder %s377, 15
        %s379 = scalar_select %p378, %s377, 15
        %p380 = scmp.lt.s32.totalorder %s27, 1
        %s381 = scalar_select %p380, %s27, 1
        %p382 = scmp.lt.s32.totalorder %s379, 15
        %s383 = scalar_select %p382, %s379, 15
        %s384 = smul.addr %s383, 2
        %s385 = smul.addr %s381, 32
        %s386 = sadd.s32 %s384, %s385
        %s387 = smul.addr %s386, 4
        %s388 = scalar_lea.vmem %s2, %s387
        %s389 = smul.u32 %s28, 4
        %s390 = sadd.s32 %s389, 4
        %p391 = scmp.lt.s32.totalorder %s390, 15
        %s392 = scalar_select %p391, %s390, 15
        %s393 = smul.u32 8, %s28
        %vm395 = vcmask 24576
        %vm396 = vsmask.f32 256
        %vm397 = vmand %vm395, %vm396
        %v398 = vld [vmem:[#allocation2] sm:$0x1]
        %v399 = vsel %vm397, 0, %v398
        %400 = vst [vmem:[#allocation2] sm:$0x1] %v399
        %v401 = vld [vmem:[#allocation2 + $0xc] sm:$0x1]
        %v402 = vsel %vm397, 0, %v401
        %403 = vst [vmem:[#allocation2 + $0xc] sm:$0x1] %v402
        %v404 = vld [vmem:[#allocation2 + $0x18] sm:$0x1]
        %v405 = vsel %vm397, 0, %v404
        %406 = vst [vmem:[#allocation2 + $0x18] sm:$0x1] %v405
        %v407 = vld [vmem:[#allocation2 + $0x24] sm:$0x1]
        %v408 = vsel %vm397, 0, %v407
        %409 = vst [vmem:[#allocation2 + $0x24] sm:$0x1] %v408
        %v410 = vld [vmem:[#allocation2 + $0x30] sm:$0x1]
        %v411 = vsel %vm397, 0, %v410
        %412 = vst [vmem:[#allocation2 + $0x30] sm:$0x1] %v411
        %v413 = vld [vmem:[#allocation2 + $0x3c] sm:$0x1]
        %v414 = vsel %vm397, 0, %v413
        %415 = vst [vmem:[#allocation2 + $0x3c] sm:$0x1] %v414
        %vm416 = vsmask.f32 7938
        %vm417 = vmand %vm395, %vm416
        %v418 = vld [vmem:[#allocation2 + $0x8] sm:$0x1]
        %v419 = vsel %vm417, 0, %v418
        %420 = vst [vmem:[#allocation2 + $0x8] sm:$0x1] %v419
        %v421 = vld [vmem:[#allocation2 + $0x14] sm:$0x1]
        %v422 = vsel %vm417, 0, %v421
        %423 = vst [vmem:[#allocation2 + $0x14] sm:$0x1] %v422
        %v424 = vld [vmem:[#allocation2 + $0x20] sm:$0x1]
        %v425 = vsel %vm417, 0, %v424
        %426 = vst [vmem:[#allocation2 + $0x20] sm:$0x1] %v425
        %v427 = vld [vmem:[#allocation2 + $0x2c] sm:$0x1]
        %v428 = vsel %vm417, 0, %v427
        %429 = vst [vmem:[#allocation2 + $0x2c] sm:$0x1] %v428
        %v430 = vld [vmem:[#allocation2 + $0x38] sm:$0x1]
        %v431 = vsel %vm417, 0, %v430
        %432 = vst [vmem:[#allocation2 + $0x38] sm:$0x1] %v431
        %v433 = vld [vmem:[#allocation2 + $0x44] sm:$0x1]
        %v434 = vsel %vm417, 0, %v433
        %435 = vst [vmem:[#allocation2 + $0x44] sm:$0x1] %v434
        %v436 = vld [vmem:[%s374] sm:$0xf]
        %v437 = vld [vmem:[%s374 + $0x4] sm:$0xf]
        %v438 = vld [vmem:[%s374 + $0x8] sm:$0xf]
        %v439 = vld [vmem:[%s374 + $0xc] sm:$0xf]
        %v440 = vld [vmem:[%s374 + $0x10] sm:$0xf]
        %v441 = vld [vmem:[%s374 + $0x14] sm:$0xf]
        %v442 = vld [vmem:[%s374 + $0x18] sm:$0xf]
        %v443 = vld [vmem:[%s374 + $0x1c] sm:$0xf]
        %vm444 = vsmask.f32 4368
        %vm445 = vmor %vm396, %vm444
        %v447 = vshrl.u32 %v436, 16
        %v449 = vrot.slane %v447, 7
        %v450 = vshll.u32 %v436, 16
        %v452 = vor.u32 %v449, %v450
        %v453 = vrot.slane %v449, 4
        %v455 = vshrl.u32 %v437, 16
        %v457 = vrot.slane %v455, 7
        %v458 = vshll.u32 %v437, 16
        %v460 = vor.u32 %v457, %v458
        %v461 = vsel %vm445, %v453, %v460
        %v462 = vrot.slane %v457, 4
        %v464 = vshrl.u32 %v438, 16
        %v466 = vrot.slane %v464, 7
        %v467 = vshll.u32 %v438, 16
        %v469 = vor.u32 %v466, %v467
        %v470 = vrot.slane %v466, 4
        %v472 = vshrl.u32 %v439, 16
        %v474 = vrot.slane %v472, 7
        %v475 = vshll.u32 %v439, 16
        %v477 = vor.u32 %v474, %v475
        %v478 = vsel %vm445, %v470, %v477
        %v479 = vrot.slane %v474, 4
        %v481 = vshrl.u32 %v440, 16
        %v483 = vrot.slane %v481, 7
        %v484 = vshll.u32 %v440, 16
        %v486 = vor.u32 %v483, %v484
        %v487 = vrot.slane %v483, 4
        %v489 = vshrl.u32 %v441, 16
        %v491 = vrot.slane %v489, 7
        %v492 = vshll.u32 %v441, 16
        %v494 = vor.u32 %v491, %v492
        %v495 = vsel %vm445, %v487, %v494
        %v496 = vrot.slane %v491, 4
        %v498 = vshrl.u32 %v442, 16
        %v500 = vrot.slane %v498, 7
        %v501 = vshll.u32 %v442, 16
        %v503 = vor.u32 %v500, %v501
        %v504 = vrot.slane %v500, 4
        %v506 = vshrl.u32 %v443, 16
        %v508 = vrot.slane %v506, 7
        %v509 = vshll.u32 %v443, 16
        %v511 = vor.u32 %v508, %v509
        %v512 = vsel %vm445, %v504, %v511
        %v513 = vrot.slane %v508, 4
        %s526 = scalar_lea.vmem [#allocation2], 12
        %vm527 = vcmask 27648
        %vm528 = vmand %vm527, %vm416
        %v529 = vld [vmem:[%s526] sm:$0xf]
        %v530 = vsel %vm528, %v452, %v529
        %531 = vst [vmem:[%s526] sm:$0xf] %v530
        %vm532 = vcmask 27648
        %533 = vst.msk [vmem:[%s526 + $0x4] sm:$0xf] %vm532, %v461
        %v534 = vld [vmem:[%s526 + $0x8] sm:$0x1]
        %v535 = vsel %vm397, %v462, %v534
        %536 = vst [vmem:[%s526 + $0x8] sm:$0x1] %v535
        %v537 = vld [vmem:[%s526 + $0xc] sm:$0xf]
        %v538 = vsel %vm528, %v469, %v537
        %539 = vst [vmem:[%s526 + $0xc] sm:$0xf] %v538
        %540 = vst.msk [vmem:[%s526 + $0x10] sm:$0xf] %vm532, %v478
        %v541 = vld [vmem:[%s526 + $0x14] sm:$0x1]
        %v542 = vsel %vm397, %v479, %v541
        %543 = vst [vmem:[%s526 + $0x14] sm:$0x1] %v542
        %v544 = vld [vmem:[%s526 + $0x18] sm:$0xf]
        %v545 = vsel %vm528, %v486, %v544
        %546 = vst [vmem:[%s526 + $0x18] sm:$0xf] %v545
        %547 = vst.msk [vmem:[%s526 + $0x1c] sm:$0xf] %vm532, %v495
        %v548 = vld [vmem:[%s526 + $0x20] sm:$0x1]
        %v549 = vsel %vm397, %v496, %v548
        %550 = vst [vmem:[%s526 + $0x20] sm:$0x1] %v549
        %v551 = vld [vmem:[%s526 + $0x24] sm:$0xf]
        %v552 = vsel %vm528, %v503, %v551
        %553 = vst [vmem:[%s526 + $0x24] sm:$0xf] %v552
        %554 = vst.msk [vmem:[%s526 + $0x28] sm:$0xf] %vm532, %v512
        %v555 = vld [vmem:[%s526 + $0x2c] sm:$0x1]
        %v556 = vsel %vm397, %v513, %v555
        %557 = vst [vmem:[%s526 + $0x2c] sm:$0x1] %v556
        %p558 = scmp.gt.s32.totalorder %s28, 0
        %v559 = vld [vmem:[%s360] sm:$0xf]
        %v560 = vld [vmem:[%s360 + $0x4] sm:$0xf]
        %s561 = scalar_select %p558, 1, 0
        %v562 = vstv %s561
        %vm563 = vcmp.eq.s32.totalorder %v562, 1
        %v564 = vsel %vm563, %v559, 0
        %v565 = vsel %vm563, %v560, 0
        %v567 = vshrl.u32 %v564, 16
        %v569 = vrot.slane %v567, 7
        %v570 = vshll.u32 %v564, 16
        %v572 = vor.u32 %v569, %v570
        %v573 = vrot.slane %v569, 4
        %v575 = vshrl.u32 %v565, 16
        %v577 = vrot.slane %v575, 7
        %v578 = vshll.u32 %v565, 16
        %v580 = vor.u32 %v577, %v578
        %v581 = vsel %vm445, %v573, %v580
        %v582 = vrot.slane %v577, 4
        %v586 = vld [vmem:[#allocation2] sm:$0xf]
        %v587 = vsel %vm528, %v572, %v586
        %588 = vst [vmem:[#allocation2] sm:$0xf] %v587
        %589 = vst.msk [vmem:[#allocation2 + $0x4] sm:$0xf] %vm532, %v581
        %v590 = vld [vmem:[#allocation2 + $0x8] sm:$0x1]
        %v591 = vsel %vm397, %v582, %v590
        %592 = vst [vmem:[#allocation2 + $0x8] sm:$0x1] %v591
        %p593 = scmp.lt.s32.totalorder %s28, 3
        %v594 = vld [vmem:[%s388] sm:$0xf]
        %v595 = vld [vmem:[%s388 + $0x4] sm:$0xf]
        %s596 = scalar_select %p593, 1, 0
        %v597 = vstv %s596
        %vm598 = vcmp.eq.s32.totalorder %v597, 1
        %v599 = vsel %vm598, %v594, 0
        %v600 = vsel %vm598, %v595, 0
        %v602 = vshrl.u32 %v599, 16
        %v604 = vrot.slane %v602, 7
        %v605 = vshll.u32 %v599, 16
        %v607 = vor.u32 %v604, %v605
        %v608 = vrot.slane %v604, 4
        %v610 = vshrl.u32 %v600, 16
        %v612 = vrot.slane %v610, 7
        %v613 = vshll.u32 %v600, 16
        %v615 = vor.u32 %v612, %v613
        %v616 = vsel %vm445, %v608, %v615
        %v617 = vrot.slane %v612, 4
        %s621 = scalar_lea.vmem [#allocation2], 60
        %v622 = vld [vmem:[%s621] sm:$0xf]
        %v623 = vsel %vm528, %v607, %v622
        %624 = vst [vmem:[%s621] sm:$0xf] %v623
        %625 = vst.msk [vmem:[%s621 + $0x4] sm:$0xf] %vm532, %v616
        %v626 = vld [vmem:[%s621 + $0x8] sm:$0x1]
        %v627 = vsel %vm397, %v617, %v626
        %628 = vst [vmem:[%s621 + $0x8] sm:$0x1] %v627
        %v629 = vld [vmem:[#allocation2] sm:$0xf]
        %v630 = vld [vmem:[#allocation2 + $0x4] sm:$0xf]
        %v631 = vld [vmem:[#allocation2 + $0xc] sm:$0xf]
        %v632 = vld [vmem:[#allocation2 + $0x10] sm:$0xf]
        %v633 = vld [vmem:[#allocation2 + $0x18] sm:$0xf]
        %v634 = vld [vmem:[#allocation2 + $0x1c] sm:$0xf]
        %v635 = vld [vmem:[#allocation2 + $0x24] sm:$0xf]
        %v636 = vld [vmem:[#allocation2 + $0x28] sm:$0xf]
        %v637 = vld [vmem:[%s3] sm:$0x3]
        %v638 = vld [vmem:[#allocation2 + $0x8] sm:$0x1]
        %v639 = vld [vmem:[#allocation2 + $0x14] sm:$0x1]
        %v640 = vld [vmem:[#allocation2 + $0x20] sm:$0x1]
        %v641 = vld [vmem:[#allocation2 + $0x2c] sm:$0x1]
        %vm642 = vsmask.f32 3328
        %vm643 = vsmask.f32 7440
        %vm644 = vmor %vm642, %vm643
        %v646 = vshrl.u32 %v629, 16
        %v648 = vrot.slane %v646, 4
        %v649 = vshll.u32 %v629, 16
        %v651 = vrot.slane %v649, 5
        %v652 = vor.u32 %v648, %v651
        %v653 = vrot.slane %v652, 4
        %v655 = vshll.u32 %v630, 16
        %v657 = vrot.slane %v655, 5
        %v658 = vsel %vm644, %v653, %v657
        %v659 = vshrl.u32 %v630, 16
        %v661 = vrot.slane %v659, 4
        %v662 = vor.u32 %v661, %v657
        %v663 = vrot.slane %v662, 4
        %v665 = vshll.u32 %v638, 16
        %v667 = vrot.slane %v665, 5
        %v668 = vsel %vm644, %v663, %v667
        %v670 = vshrl.u32 %v631, 16
        %v672 = vrot.slane %v670, 4
        %v673 = vshll.u32 %v631, 16
        %v675 = vrot.slane %v673, 5
        %v676 = vor.u32 %v672, %v675
        %v677 = vrot.slane %v676, 4
        %v679 = vshll.u32 %v632, 16
        %v681 = vrot.slane %v679, 5
        %v682 = vsel %vm644, %v677, %v681
        %v683 = vshrl.u32 %v632, 16
        %v685 = vrot.slane %v683, 4
        %v686 = vor.u32 %v685, %v681
        %v687 = vrot.slane %v686, 4
        %v689 = vshll.u32 %v639, 16
        %v691 = vrot.slane %v689, 5
        %v692 = vsel %vm644, %v687, %v691
        %v694 = vshrl.u32 %v633, 16
        %v696 = vrot.slane %v694, 4
        %v697 = vshll.u32 %v633, 16
        %v699 = vrot.slane %v697, 5
        %v700 = vor.u32 %v696, %v699
        %v701 = vrot.slane %v700, 4
        %v703 = vshll.u32 %v634, 16
        %v705 = vrot.slane %v703, 5
        %v706 = vsel %vm644, %v701, %v705
        %v707 = vshrl.u32 %v634, 16
        %v709 = vrot.slane %v707, 4
        %v710 = vor.u32 %v709, %v705
        %v711 = vrot.slane %v710, 4
        %v713 = vshll.u32 %v640, 16
        %v715 = vrot.slane %v713, 5
        %v716 = vsel %vm644, %v711, %v715
        %v718 = vshrl.u32 %v635, 16
        %v720 = vrot.slane %v718, 4
        %v721 = vshll.u32 %v635, 16
        %v723 = vrot.slane %v721, 5
        %v724 = vor.u32 %v720, %v723
        %v725 = vrot.slane %v724, 4
        %v727 = vshll.u32 %v636, 16
        %v729 = vrot.slane %v727, 5
        %v730 = vsel %vm644, %v725, %v729
        %v731 = vshrl.u32 %v636, 16
        %v733 = vrot.slane %v731, 4
        %v734 = vor.u32 %v733, %v729
        %v735 = vrot.slane %v734, 4
        %v737 = vshll.u32 %v641, 16
        %v739 = vrot.slane %v737, 5
        %v740 = vsel %vm644, %v735, %v739
        %s741 = scalar_lea.vmem %s3, 2
        %v742 = vld [vmem:[%s741] sm:$0x3]
        %v743 = vunpack.c.l.b16 %v658
        %v744 = vunpack.c.l.b16 %v668
        %v745 = vunpack.c.l.b16 %v682
        %v746 = vunpack.c.l.b16 %v692
        %v747 = vunpack.c.l.b16 %v706
        %v748 = vunpack.c.l.b16 %v716
        %v749 = vunpack.c.l.b16 %v730
        %v750 = vunpack.c.l.b16 %v740
        %v751 = vpack.c.b16 %v744, %v743
        %v752 = vpack.c.b16 %v746, %v745
        %v753 = vpack.c.b16 %v748, %v747
        %v754 = vpack.c.b16 %v750, %v749
        %vm755 = vcmask 31744
        %v757 = vsel %vm755, %v751, 0
        %v760 = vsel %vm755, %v752, 0
        %v763 = vsel %vm755, %v753, 0
        %v766 = vsel %vm755, %v754, 0
        %vm768 = vcmask 1041408
        %v770 = vsel %vm768, %v742, 0
        %772 = vmatprep.subr.bf16.mxu0 0
        %773 = vmatpush1.bf16.msra.mxu0 %v770
        %774 = vmatprep.subr.bf16.mxu0 0
        %775 = vmatpush1.bf16.msra.mxu0 0
        %776 = vmatprep.subr.bf16.mxu0 0
        %777 = vmatpush1.bf16.msra.mxu0 0
        %778 = vmatprep.subr.bf16.mxu0 0
        %779 = vmatpush1.bf16.msra.mxu0 0
        %780 = vmatprep.subr.bf16.mxu0 0
        %781 = vmatpush1.bf16.msra.mxu0 0
        %782 = vmatprep.subr.bf16.mxu0 0
        %783 = vmatpush1.bf16.msra.mxu0 0
        %784 = vmatprep.subr.bf16.mxu0 0
        %785 = vmatpush1.bf16.msra.mxu0 0
        %786 = vmatprep.subr.bf16.mxu0 0
        %787 = vmatpush1.bf16.msra.mxu0 0
        %788 = vmatprep.subr.bf16.mxu0 0
        %789 = vmatpush1.bf16.msra.mxu0 0
        %790 = vmatprep.subr.bf16.mxu0 0
        %791 = vmatpush1.bf16.msra.mxu0 0
        %792 = vmatprep.subr.bf16.mxu0 0
        %793 = vmatpush1.bf16.msra.mxu0 0
        %794 = vmatprep.subr.bf16.mxu0 0
        %795 = vmatpush1.bf16.msra.mxu0 0
        %796 = vmatprep.subr.bf16.mxu0 0
        %797 = vmatpush1.bf16.msra.mxu0 0
        %798 = vmatprep.subr.bf16.mxu0 0
        %799 = vmatpush1.bf16.msra.mxu0 0
        %800 = vmatprep.subr.bf16.mxu0 0
        %801 = vmatpush1.bf16.msra.mxu0 0
        %802 = vmatprep.subr.bf16.mxu0 0
        %803 = vmatpush1.bf16.msra.mxu0 0
        %804 = vmatprep.mubr.bf16.mxu0 0
        %805 = vmatmul.mubr.bf16.gmra.mrb[0].mxu0 %v757
        %v806 = vpop.f32.mrb[0].mxu0
        %v807 = vadd.f32 0.0, %v806
        %v808 = vpop.f32.mrb[0].mxu0
        %v809 = vpop.f32.mrb[0].mxu0
        %v810 = vadd.f32 0.0, %v809
        %v811 = vpop.f32.mrb[0].mxu0
        %812 = vmatprep.mubr.bf16.mxu0 0
        %813 = vmatmul.mubr.bf16.gmra.mrb[0].mxu0 %v760
        %v814 = vpop.f32.mrb[0].mxu0
        %v815 = vadd.f32 0.0, %v814
        %v816 = vpop.f32.mrb[0].mxu0
        %v817 = vpop.f32.mrb[0].mxu0
        %v818 = vadd.f32 0.0, %v817
        %v819 = vpop.f32.mrb[0].mxu0
        %820 = vmatprep.mubr.bf16.mxu0 0
        %821 = vmatmul.mubr.bf16.gmra.mrb[0].mxu0 %v763
        %v822 = vpop.f32.mrb[0].mxu0
        %v823 = vadd.f32 0.0, %v822
        %v824 = vpop.f32.mrb[0].mxu0
        %v825 = vpop.f32.mrb[0].mxu0
        %v826 = vadd.f32 0.0, %v825
        %v827 = vpop.f32.mrb[0].mxu0
        %828 = vmatprep.mubr.bf16.mxu0 0
        %829 = vmatmul.mubr.bf16.gmra.mrb[0].mxu0 %v766
        %v830 = vpop.f32.mrb[0].mxu0
        %v831 = vadd.f32 0.0, %v830
        %v832 = vpop.f32.mrb[0].mxu0
        %v833 = vpop.f32.mrb[0].mxu0
        %v834 = vadd.f32 0.0, %v833
        %v835 = vpop.f32.mrb[0].mxu0
        %836 = vdwg.mxu0
        %v845 = vunpack.c.l.b16 %v629
        %v846 = vunpack.c.l.b16 %v630
        %v847 = vunpack.c.l.b16 %v631
        %v848 = vunpack.c.l.b16 %v632
        %v849 = vunpack.c.l.b16 %v633
        %v850 = vunpack.c.l.b16 %v634
        %v851 = vunpack.c.l.b16 %v635
        %v852 = vunpack.c.l.b16 %v636
        %v853 = vpack.c.b16 %v846, %v845
        %v854 = vpack.c.b16 %v848, %v847
        %v855 = vpack.c.b16 %v850, %v849
        %v856 = vpack.c.b16 %v852, %v851
        %v858 = vsel %vm755, %v853, 0
        %v861 = vsel %vm755, %v854, 0
        %v864 = vsel %vm755, %v855, 0
        %v867 = vsel %vm755, %v856, 0
        %v870 = vsel %vm768, %v637, 0
        %872 = vmatprep.subr.bf16.mxu0 0
        %873 = vmatpush1.bf16.msra.mxu0 %v870
        %874 = vmatprep.subr.bf16.mxu0 0
        %875 = vmatpush1.bf16.msra.mxu0 0
        %876 = vmatprep.subr.bf16.mxu0 0
        %877 = vmatpush1.bf16.msra.mxu0 0
        %878 = vmatprep.subr.bf16.mxu0 0
        %879 = vmatpush1.bf16.msra.mxu0 0
        %880 = vmatprep.subr.bf16.mxu0 0
        %881 = vmatpush1.bf16.msra.mxu0 0
        %882 = vmatprep.subr.bf16.mxu0 0
        %883 = vmatpush1.bf16.msra.mxu0 0
        %884 = vmatprep.subr.bf16.mxu0 0
        %885 = vmatpush1.bf16.msra.mxu0 0
        %886 = vmatprep.subr.bf16.mxu0 0
        %887 = vmatpush1.bf16.msra.mxu0 0
        %888 = vmatprep.subr.bf16.mxu0 0
        %889 = vmatpush1.bf16.msra.mxu0 0
        %890 = vmatprep.subr.bf16.mxu0 0
        %891 = vmatpush1.bf16.msra.mxu0 0
        %892 = vmatprep.subr.bf16.mxu0 0
        %893 = vmatpush1.bf16.msra.mxu0 0
        %894 = vmatprep.subr.bf16.mxu0 0
        %895 = vmatpush1.bf16.msra.mxu0 0
        %896 = vmatprep.subr.bf16.mxu0 0
        %897 = vmatpush1.bf16.msra.mxu0 0
        %898 = vmatprep.subr.bf16.mxu0 0
        %899 = vmatpush1.bf16.msra.mxu0 0
        %900 = vmatprep.subr.bf16.mxu0 0
        %901 = vmatpush1.bf16.msra.mxu0 0
        %902 = vmatprep.subr.bf16.mxu0 0
        %903 = vmatpush1.bf16.msra.mxu0 0
        %904 = vmatprep.mubr.bf16.mxu0 0
        %905 = vmatmul.mubr.bf16.gmra.mrb[0].mxu0 %v858
        %v906 = vpop.f32.mrb[0].mxu0
        %v907 = vadd.f32 %v807, %v906
        %v908 = vpop.f32.mrb[0].mxu0
        %v909 = vpop.f32.mrb[0].mxu0
        %v910 = vadd.f32 %v810, %v909
        %v911 = vpop.f32.mrb[0].mxu0
        %912 = vmatprep.mubr.bf16.mxu0 0
        %913 = vmatmul.mubr.bf16.gmra.mrb[0].mxu0 %v861
        %v914 = vpop.f32.mrb[0].mxu0
        %v915 = vadd.f32 %v815, %v914
        %v916 = vpop.f32.mrb[0].mxu0
        %v917 = vpop.f32.mrb[0].mxu0
        %v918 = vadd.f32 %v818, %v917
        %v919 = vpop.f32.mrb[0].mxu0
        %920 = vmatprep.mubr.bf16.mxu0 0
        %921 = vmatmul.mubr.bf16.gmra.mrb[0].mxu0 %v864
        %v922 = vpop.f32.mrb[0].mxu0
        %v923 = vadd.f32 %v823, %v922
        %v924 = vpop.f32.mrb[0].mxu0
        %v925 = vpop.f32.mrb[0].mxu0
        %v926 = vadd.f32 %v826, %v925
        %v927 = vpop.f32.mrb[0].mxu0
        %928 = vmatprep.mubr.bf16.mxu0 0
        %929 = vmatmul.mubr.bf16.gmra.mrb[0].mxu0 %v867
        %v930 = vpop.f32.mrb[0].mxu0
        %v931 = vadd.f32 %v831, %v930
        %v932 = vpop.f32.mrb[0].mxu0
        %v933 = vpop.f32.mrb[0].mxu0
        %v934 = vadd.f32 %v834, %v933
        %v935 = vpop.f32.mrb[0].mxu0
        %936 = vdwg.mxu0
        %v937 = vld [vmem:[#allocation2] sm:$0xe]
        %v938 = vld [vmem:[#allocation2 + $0xc] sm:$0xe]
        %v939 = vld [vmem:[#allocation2 + $0x18] sm:$0xe]
        %v940 = vld [vmem:[#allocation2 + $0x24] sm:$0xe]
        %vm949 = vcmask 1042432
        %vm950 = vcmask 1046532
        %vm951 = vmor %vm949, %vm950
        %v952 = vrot.slane %v937, 5
        %v953 = vrot.slane %v952, 4
        %v954 = vrot.slane %v630, 5
        %v955 = vsel %vm951, %v953, %v954
        %v956 = vrot.slane %v954, 4
        %v957 = vrot.slane %v638, 5
        %v958 = vsel %vm951, %v956, %v957
        %v959 = vrot.slane %v938, 5
        %v960 = vrot.slane %v959, 4
        %v961 = vrot.slane %v632, 5
        %v962 = vsel %vm951, %v960, %v961
        %v963 = vrot.slane %v961, 4
        %v964 = vrot.slane %v639, 5
        %v965 = vsel %vm951, %v963, %v964
        %v966 = vrot.slane %v939, 5
        %v967 = vrot.slane %v966, 4
        %v968 = vrot.slane %v634, 5
        %v969 = vsel %vm951, %v967, %v968
        %v970 = vrot.slane %v968, 4
        %v971 = vrot.slane %v640, 5
        %v972 = vsel %vm951, %v970, %v971
        %v973 = vrot.slane %v940, 5
        %v974 = vrot.slane %v973, 4
        %v975 = vrot.slane %v636, 5
        %v976 = vsel %vm951, %v974, %v975
        %v977 = vrot.slane %v975, 4
        %v978 = vrot.slane %v641, 5
        %v979 = vsel %vm951, %v977, %v978
        %s980 = scalar_lea.vmem %s3, 4
        %v981 = vld [vmem:[%s980] sm:$0x3]
        %v982 = vunpack.c.l.b16 %v955
        %v983 = vunpack.c.l.b16 %v958
        %v984 = vunpack.c.l.b16 %v962
        %v985 = vunpack.c.l.b16 %v965
        %v986 = vunpack.c.l.b16 %v969
        %v987 = vunpack.c.l.b16 %v972
        %v988 = vunpack.c.l.b16 %v976
        %v989 = vunpack.c.l.b16 %v979
        %v990 = vpack.c.b16 %v983, %v982
        %v991 = vpack.c.b16 %v985, %v984
        %v992 = vpack.c.b16 %v987, %v986
        %v993 = vpack.c.b16 %v989, %v988
        %v995 = vsel %vm755, %v990, 0
        %v998 = vsel %vm755, %v991, 0
        %v1001 = vsel %vm755, %v992, 0
        %v1004 = vsel %vm755, %v993, 0
        %v1007 = vsel %vm768, %v981, 0
        %1009 = vmatprep.subr.bf16.mxu0 0
        %1010 = vmatpush1.bf16.msra.mxu0 %v1007
        %1011 = vmatprep.subr.bf16.mxu0 0
        %1012 = vmatpush1.bf16.msra.mxu0 0
        %1013 = vmatprep.subr.bf16.mxu0 0
        %1014 = vmatpush1.bf16.msra.mxu0 0
        %1015 = vmatprep.subr.bf16.mxu0 0
        %1016 = vmatpush1.bf16.msra.mxu0 0
        %1017 = vmatprep.subr.bf16.mxu0 0
        %1018 = vmatpush1.bf16.msra.mxu0 0
        %1019 = vmatprep.subr.bf16.mxu0 0
        %1020 = vmatpush1.bf16.msra.mxu0 0
        %1021 = vmatprep.subr.bf16.mxu0 0
        %1022 = vmatpush1.bf16.msra.mxu0 0
        %1023 = vmatprep.subr.bf16.mxu0 0
        %1024 = vmatpush1.bf16.msra.mxu0 0
        %1025 = vmatprep.subr.bf16.mxu0 0
        %1026 = vmatpush1.bf16.msra.mxu0 0
        %1027 = vmatprep.subr.bf16.mxu0 0
        %1028 = vmatpush1.bf16.msra.mxu0 0
        %1029 = vmatprep.subr.bf16.mxu0 0
        %1030 = vmatpush1.bf16.msra.mxu0 0
        %1031 = vmatprep.subr.bf16.mxu0 0
        %1032 = vmatpush1.bf16.msra.mxu0 0
        %1033 = vmatprep.subr.bf16.mxu0 0
        %1034 = vmatpush1.bf16.msra.mxu0 0
        %1035 = vmatprep.subr.bf16.mxu0 0
        %1036 = vmatpush1.bf16.msra.mxu0 0
        %1037 = vmatprep.subr.bf16.mxu0 0
        %1038 = vmatpush1.bf16.msra.mxu0 0
        %1039 = vmatprep.subr.bf16.mxu0 0
        %1040 = vmatpush1.bf16.msra.mxu0 0
        %1041 = vmatprep.mubr.bf16.mxu0 0
        %1042 = vmatmul.mubr.bf16.gmra.mrb[0].mxu0 %v995
        %v1043 = vpop.f32.mrb[0].mxu0
        %v1044 = vadd.f32 0.0, %v1043
        %v1045 = vpop.f32.mrb[0].mxu0
        %v1046 = vpop.f32.mrb[0].mxu0
        %v1047 = vadd.f32 0.0, %v1046
        %v1048 = vpop.f32.mrb[0].mxu0
        %1049 = vmatprep.mubr.bf16.mxu0 0
        %1050 = vmatmul.mubr.bf16.gmra.mrb[0].mxu0 %v998
        %v1051 = vpop.f32.mrb[0].mxu0
        %v1052 = vadd.f32 0.0, %v1051
        %v1053 = vpop.f32.mrb[0].mxu0
        %v1054 = vpop.f32.mrb[0].mxu0
        %v1055 = vadd.f32 0.0, %v1054
        %v1056 = vpop.f32.mrb[0].mxu0
        %1057 = vmatprep.mubr.bf16.mxu0 0
        %1058 = vmatmul.mubr.bf16.gmra.mrb[0].mxu0 %v1001
        %v1059 = vpop.f32.mrb[0].mxu0
        %v1060 = vadd.f32 0.0, %v1059
        %v1061 = vpop.f32.mrb[0].mxu0
        %v1062 = vpop.f32.mrb[0].mxu0
        %v1063 = vadd.f32 0.0, %v1062
        %v1064 = vpop.f32.mrb[0].mxu0
        %1065 = vmatprep.mubr.bf16.mxu0 0
        %1066 = vmatmul.mubr.bf16.gmra.mrb[0].mxu0 %v1004
        %v1067 = vpop.f32.mrb[0].mxu0
        %v1068 = vadd.f32 0.0, %v1067
        %v1069 = vpop.f32.mrb[0].mxu0
        %v1070 = vpop.f32.mrb[0].mxu0
        %v1071 = vadd.f32 0.0, %v1070
        %v1072 = vpop.f32.mrb[0].mxu0
        %1073 = vdwg.mxu0
        %v1074 = vadd.f32 %v907, %v1044
        %v1075 = vadd.f32 %v910, %v1047
        %v1076 = vadd.f32 %v915, %v1052
        %v1077 = vadd.f32 %v918, %v1055
        %v1078 = vadd.f32 %v923, %v1060
        %v1079 = vadd.f32 %v926, %v1063
        %v1080 = vadd.f32 %v931, %v1068
        %v1081 = vadd.f32 %v934, %v1071
        %v1082 = vld [vmem:[%s526] sm:$0xf]
        %v1083 = vld [vmem:[%s526 + $0x4] sm:$0xf]
        %v1084 = vld [vmem:[%s526 + $0xc] sm:$0xf]
        %v1085 = vld [vmem:[%s526 + $0x10] sm:$0xf]
        %v1086 = vld [vmem:[%s526 + $0x18] sm:$0xf]
        %v1087 = vld [vmem:[%s526 + $0x1c] sm:$0xf]
        %v1088 = vld [vmem:[%s526 + $0x24] sm:$0xf]
        %v1089 = vld [vmem:[%s526 + $0x28] sm:$0xf]
        %s1090 = scalar_lea.vmem %s3, 6
        %v1091 = vld [vmem:[%s1090] sm:$0x3]
        %v1100 = vunpack.c.l.b16 %v1082
        %v1101 = vunpack.c.l.b16 %v1083
        %v1102 = vunpack.c.l.b16 %v1084
        %v1103 = vunpack.c.l.b16 %v1085
        %v1104 = vunpack.c.l.b16 %v1086
        %v1105 = vunpack.c.l.b16 %v1087
        %v1106 = vunpack.c.l.b16 %v1088
        %v1107 = vunpack.c.l.b16 %v1089
        %v1108 = vpack.c.b16 %v1101, %v1100
        %v1109 = vpack.c.b16 %v1103, %v1102
        %v1110 = vpack.c.b16 %v1105, %v1104
        %v1111 = vpack.c.b16 %v1107, %v1106
        %v1113 = vsel %vm755, %v1108, 0
        %v1116 = vsel %vm755, %v1109, 0
        %v1119 = vsel %vm755, %v1110, 0
        %v1122 = vsel %vm755, %v1111, 0
        %v1125 = vsel %vm768, %v1091, 0
        %1127 = vmatprep.subr.bf16.mxu0 0
        %1128 = vmatpush1.bf16.msra.mxu0 %v1125
        %1129 = vmatprep.subr.bf16.mxu0 0
        %1130 = vmatpush1.bf16.msra.mxu0 0
        %1131 = vmatprep.subr.bf16.mxu0 0
        %1132 = vmatpush1.bf16.msra.mxu0 0
        %1133 = vmatprep.subr.bf16.mxu0 0
        %1134 = vmatpush1.bf16.msra.mxu0 0
        %1135 = vmatprep.subr.bf16.mxu0 0
        %1136 = vmatpush1.bf16.msra.mxu0 0
        %1137 = vmatprep.subr.bf16.mxu0 0
        %1138 = vmatpush1.bf16.msra.mxu0 0
        %1139 = vmatprep.subr.bf16.mxu0 0
        %1140 = vmatpush1.bf16.msra.mxu0 0
        %1141 = vmatprep.subr.bf16.mxu0 0
        %1142 = vmatpush1.bf16.msra.mxu0 0
        %1143 = vmatprep.subr.bf16.mxu0 0
        %1144 = vmatpush1.bf16.msra.mxu0 0
        %1145 = vmatprep.subr.bf16.mxu0 0
        %1146 = vmatpush1.bf16.msra.mxu0 0
        %1147 = vmatprep.subr.bf16.mxu0 0
        %1148 = vmatpush1.bf16.msra.mxu0 0
        %1149 = vmatprep.subr.bf16.mxu0 0
        %1150 = vmatpush1.bf16.msra.mxu0 0
        %1151 = vmatprep.subr.bf16.mxu0 0
        %1152 = vmatpush1.bf16.msra.mxu0 0
        %1153 = vmatprep.subr.bf16.mxu0 0
        %1154 = vmatpush1.bf16.msra.mxu0 0
        %1155 = vmatprep.subr.bf16.mxu0 0
        %1156 = vmatpush1.bf16.msra.mxu0 0
        %1157 = vmatprep.subr.bf16.mxu0 0
        %1158 = vmatpush1.bf16.msra.mxu0 0
        %1159 = vmatprep.mubr.bf16.mxu0 0
        %1160 = vmatmul.mubr.bf16.gmra.mrb[0].mxu0 %v1113
        %v1161 = vpop.f32.mrb[0].mxu0
        %v1162 = vadd.f32 0.0, %v1161
        %v1163 = vpop.f32.mrb[0].mxu0
        %v1164 = vpop.f32.mrb[0].mxu0
        %v1165 = vadd.f32 0.0, %v1164
        %v1166 = vpop.f32.mrb[0].mxu0
        %1167 = vmatprep.mubr.bf16.mxu0 0
        %1168 = vmatmul.mubr.bf16.gmra.mrb[0].mxu0 %v1116
        %v1169 = vpop.f32.mrb[0].mxu0
        %v1170 = vadd.f32 0.0, %v1169
        %v1171 = vpop.f32.mrb[0].mxu0
        %v1172 = vpop.f32.mrb[0].mxu0
        %v1173 = vadd.f32 0.0, %v1172
        %v1174 = vpop.f32.mrb[0].mxu0
        %1175 = vmatprep.mubr.bf16.mxu0 0
        %1176 = vmatmul.mubr.bf16.gmra.mrb[0].mxu0 %v1119
        %v1177 = vpop.f32.mrb[0].mxu0
        %v1178 = vadd.f32 0.0, %v1177
        %v1179 = vpop.f32.mrb[0].mxu0
        %v1180 = vpop.f32.mrb[0].mxu0
        %v1181 = vadd.f32 0.0, %v1180
        %v1182 = vpop.f32.mrb[0].mxu0
        %1183 = vmatprep.mubr.bf16.mxu0 0
        %1184 = vmatmul.mubr.bf16.gmra.mrb[0].mxu0 %v1122
        %v1185 = vpop.f32.mrb[0].mxu0
        %v1186 = vadd.f32 0.0, %v1185
        %v1187 = vpop.f32.mrb[0].mxu0
        %v1188 = vpop.f32.mrb[0].mxu0
        %v1189 = vadd.f32 0.0, %v1188
        %v1190 = vpop.f32.mrb[0].mxu0
        %1191 = vdwg.mxu0
        %v1192 = vadd.f32 %v1074, %v1162
        %v1193 = vadd.f32 %v1075, %v1165
        %v1194 = vadd.f32 %v1076, %v1170
        %v1195 = vadd.f32 %v1077, %v1173
        %v1196 = vadd.f32 %v1078, %v1178
        %v1197 = vadd.f32 %v1079, %v1181
        %v1198 = vadd.f32 %v1080, %v1186
        %v1199 = vadd.f32 %v1081, %v1189
        %v1200 = vld [vmem:[%s526] sm:$0xf]
        %v1201 = vld [vmem:[%s526 + $0x4] sm:$0xf]
        %v1202 = vld [vmem:[%s526 + $0x8] sm:$0x1]
        %v1203 = vld [vmem:[%s526 + $0xc] sm:$0xf]
        %v1204 = vld [vmem:[%s526 + $0x10] sm:$0xf]
        %v1205 = vld [vmem:[%s526 + $0x14] sm:$0x1]
        %v1206 = vld [vmem:[%s526 + $0x18] sm:$0xf]
        %v1207 = vld [vmem:[%s526 + $0x1c] sm:$0xf]
        %v1208 = vld [vmem:[%s526 + $0x20] sm:$0x1]
        %v1209 = vld [vmem:[%s526 + $0x24] sm:$0xf]
        %v1210 = vld [vmem:[%s526 + $0x28] sm:$0xf]
        %v1211 = vld [vmem:[%s526 + $0x2c] sm:$0x1]
        %v1213 = vshrl.u32 %v1200, 16
        %v1215 = vrot.slane %v1213, 4
        %v1216 = vshll.u32 %v1200, 16
        %v1218 = vrot.slane %v1216, 5
        %v1219 = vor.u32 %v1215, %v1218
        %v1220 = vrot.slane %v1219, 4
        %v1222 = vshll.u32 %v1201, 16
        %v1224 = vrot.slane %v1222, 5
        %v1225 = vsel %vm644, %v1220, %v1224
        %v1226 = vshrl.u32 %v1201, 16
        %v1228 = vrot.slane %v1226, 4
        %v1229 = vor.u32 %v1228, %v1224
        %v1230 = vrot.slane %v1229, 4
        %v1232 = vshll.u32 %v1202, 16
        %v1234 = vrot.slane %v1232, 5
        %v1235 = vsel %vm644, %v1230, %v1234
        %v1237 = vshrl.u32 %v1203, 16
        %v1239 = vrot.slane %v1237, 4
        %v1240 = vshll.u32 %v1203, 16
        %v1242 = vrot.slane %v1240, 5
        %v1243 = vor.u32 %v1239, %v1242
        %v1244 = vrot.slane %v1243, 4
        %v1246 = vshll.u32 %v1204, 16
        %v1248 = vrot.slane %v1246, 5
        %v1249 = vsel %vm644, %v1244, %v1248
        %v1250 = vshrl.u32 %v1204, 16
        %v1252 = vrot.slane %v1250, 4
        %v1253 = vor.u32 %v1252, %v1248
        %v1254 = vrot.slane %v1253, 4
        %v1256 = vshll.u32 %v1205, 16
        %v1258 = vrot.slane %v1256, 5
        %v1259 = vsel %vm644, %v1254, %v1258
        %v1261 = vshrl.u32 %v1206, 16
        %v1263 = vrot.slane %v1261, 4
        %v1264 = vshll.u32 %v1206, 16
        %v1266 = vrot.slane %v1264, 5
        %v1267 = vor.u32 %v1263, %v1266
        %v1268 = vrot.slane %v1267, 4
        %v1270 = vshll.u32 %v1207, 16
        %v1272 = vrot.slane %v1270, 5
        %v1273 = vsel %vm644, %v1268, %v1272
        %v1274 = vshrl.u32 %v1207, 16
        %v1276 = vrot.slane %v1274, 4
        %v1277 = vor.u32 %v1276, %v1272
        %v1278 = vrot.slane %v1277, 4
        %v1280 = vshll.u32 %v1208, 16
        %v1282 = vrot.slane %v1280, 5
        %v1283 = vsel %vm644, %v1278, %v1282
        %v1285 = vshrl.u32 %v1209, 16
        %v1287 = vrot.slane %v1285, 4
        %v1288 = vshll.u32 %v1209, 16
        %v1290 = vrot.slane %v1288, 5
        %v1291 = vor.u32 %v1287, %v1290
        %v1292 = vrot.slane %v1291, 4
        %v1294 = vshll.u32 %v1210, 16
        %v1296 = vrot.slane %v1294, 5
        %v1297 = vsel %vm644, %v1292, %v1296
        %v1298 = vshrl.u32 %v1210, 16
        %v1300 = vrot.slane %v1298, 4
        %v1301 = vor.u32 %v1300, %v1296
        %v1302 = vrot.slane %v1301, 4
        %v1304 = vshll.u32 %v1211, 16
        %v1306 = vrot.slane %v1304, 5
        %v1307 = vsel %vm644, %v1302, %v1306
        %s1308 = scalar_lea.vmem %s3, 8
        %v1309 = vld [vmem:[%s1308] sm:$0x3]
        %v1310 = vunpack.c.l.b16 %v1225
        %v1311 = vunpack.c.l.b16 %v1235
        %v1312 = vunpack.c.l.b16 %v1249
        %v1313 = vunpack.c.l.b16 %v1259
        %v1314 = vunpack.c.l.b16 %v1273
        %v1315 = vunpack.c.l.b16 %v1283
        %v1316 = vunpack.c.l.b16 %v1297
        %v1317 = vunpack.c.l.b16 %v1307
        %v1318 = vpack.c.b16 %v1311, %v1310
        %v1319 = vpack.c.b16 %v1313, %v1312
        %v1320 = vpack.c.b16 %v1315, %v1314
        %v1321 = vpack.c.b16 %v1317, %v1316
        %v1323 = vsel %vm755, %v1318, 0
        %v1326 = vsel %vm755, %v1319, 0
        %v1329 = vsel %vm755, %v1320, 0
        %v1332 = vsel %vm755, %v1321, 0
        %v1335 = vsel %vm768, %v1309, 0
        %1337 = vmatprep.subr.bf16.mxu0 0
        %1338 = vmatpush1.bf16.msra.mxu0 %v1335
        %1339 = vmatprep.subr.bf16.mxu0 0
        %1340 = vmatpush1.bf16.msra.mxu0 0
        %1341 = vmatprep.subr.bf16.mxu0 0
        %1342 = vmatpush1.bf16.msra.mxu0 0
        %1343 = vmatprep.subr.bf16.mxu0 0
        %1344 = vmatpush1.bf16.msra.mxu0 0
        %1345 = vmatprep.subr.bf16.mxu0 0
        %1346 = vmatpush1.bf16.msra.mxu0 0
        %1347 = vmatprep.subr.bf16.mxu0 0
        %1348 = vmatpush1.bf16.msra.mxu0 0
        %1349 = vmatprep.subr.bf16.mxu0 0
        %1350 = vmatpush1.bf16.msra.mxu0 0
        %1351 = vmatprep.subr.bf16.mxu0 0
        %1352 = vmatpush1.bf16.msra.mxu0 0
        %1353 = vmatprep.subr.bf16.mxu0 0
        %1354 = vmatpush1.bf16.msra.mxu0 0
        %1355 = vmatprep.subr.bf16.mxu0 0
        %1356 = vmatpush1.bf16.msra.mxu0 0
        %1357 = vmatprep.subr.bf16.mxu0 0
        %1358 = vmatpush1.bf16.msra.mxu0 0
        %1359 = vmatprep.subr.bf16.mxu0 0
        %1360 = vmatpush1.bf16.msra.mxu0 0
        %1361 = vmatprep.subr.bf16.mxu0 0
        %1362 = vmatpush1.bf16.msra.mxu0 0
        %1363 = vmatprep.subr.bf16.mxu0 0
        %1364 = vmatpush1.bf16.msra.mxu0 0
        %1365 = vmatprep.subr.bf16.mxu0 0
        %1366 = vmatpush1.bf16.msra.mxu0 0
        %1367 = vmatprep.subr.bf16.mxu0 0
        %1368 = vmatpush1.bf16.msra.mxu0 0
        %1369 = vmatprep.mubr.bf16.mxu0 0
        %1370 = vmatmul.mubr.bf16.gmra.mrb[0].mxu0 %v1323
        %v1371 = vpop.f32.mrb[0].mxu0
        %v1372 = vadd.f32 0.0, %v1371
        %v1373 = vpop.f32.mrb[0].mxu0
        %v1374 = vpop.f32.mrb[0].mxu0
        %v1375 = vadd.f32 0.0, %v1374
        %v1376 = vpop.f32.mrb[0].mxu0
        %1377 = vmatprep.mubr.bf16.mxu0 0
        %1378 = vmatmul.mubr.bf16.gmra.mrb[0].mxu0 %v1326
        %v1379 = vpop.f32.mrb[0].mxu0
        %v1380 = vadd.f32 0.0, %v1379
        %v1381 = vpop.f32.mrb[0].mxu0
        %v1382 = vpop.f32.mrb[0].mxu0
        %v1383 = vadd.f32 0.0, %v1382
        %v1384 = vpop.f32.mrb[0].mxu0
        %1385 = vmatprep.mubr.bf16.mxu0 0
        %1386 = vmatmul.mubr.bf16.gmra.mrb[0].mxu0 %v1329
        %v1387 = vpop.f32.mrb[0].mxu0
        %v1388 = vadd.f32 0.0, %v1387
        %v1389 = vpop.f32.mrb[0].mxu0
        %v1390 = vpop.f32.mrb[0].mxu0
        %v1391 = vadd.f32 0.0, %v1390
        %v1392 = vpop.f32.mrb[0].mxu0
        %1393 = vmatprep.mubr.bf16.mxu0 0
        %1394 = vmatmul.mubr.bf16.gmra.mrb[0].mxu0 %v1332
        %v1395 = vpop.f32.mrb[0].mxu0
        %v1396 = vadd.f32 0.0, %v1395
        %v1397 = vpop.f32.mrb[0].mxu0
        %v1398 = vpop.f32.mrb[0].mxu0
        %v1399 = vadd.f32 0.0, %v1398
        %v1400 = vpop.f32.mrb[0].mxu0
        %1401 = vdwg.mxu0
        %v1402 = vadd.f32 %v1192, %v1372
        %v1403 = vadd.f32 %v1193, %v1375
        %v1404 = vadd.f32 %v1194, %v1380
        %v1405 = vadd.f32 %v1195, %v1383
        %v1406 = vadd.f32 %v1196, %v1388
        %v1407 = vadd.f32 %v1197, %v1391
        %v1408 = vadd.f32 %v1198, %v1396
        %v1409 = vadd.f32 %v1199, %v1399
        %v1410 = vld [vmem:[%s526] sm:$0xe]
        %v1411 = vld [vmem:[%s526 + $0xc] sm:$0xe]
        %v1412 = vld [vmem:[%s526 + $0x18] sm:$0xe]
        %v1413 = vld [vmem:[%s526 + $0x24] sm:$0xe]
        %v1426 = vrot.slane %v1410, 5
        %v1427 = vrot.slane %v1426, 4
        %v1428 = vrot.slane %v1201, 5
        %v1429 = vsel %vm951, %v1427, %v1428
        %v1430 = vrot.slane %v1428, 4
        %v1431 = vrot.slane %v1202, 5
        %v1432 = vsel %vm951, %v1430, %v1431
        %v1433 = vrot.slane %v1411, 5
        %v1434 = vrot.slane %v1433, 4
        %v1435 = vrot.slane %v1204, 5
        %v1436 = vsel %vm951, %v1434, %v1435
        %v1437 = vrot.slane %v1435, 4
        %v1438 = vrot.slane %v1205, 5
        %v1439 = vsel %vm951, %v1437, %v1438
        %v1440 = vrot.slane %v1412, 5
        %v1441 = vrot.slane %v1440, 4
        %v1442 = vrot.slane %v1207, 5
        %v1443 = vsel %vm951, %v1441, %v1442
        %v1444 = vrot.slane %v1442, 4
        %v1445 = vrot.slane %v1208, 5
        %v1446 = vsel %vm951, %v1444, %v1445
        %v1447 = vrot.slane %v1413, 5
        %v1448 = vrot.slane %v1447, 4
        %v1449 = vrot.slane %v1210, 5
        %v1450 = vsel %vm951, %v1448, %v1449
        %v1451 = vrot.slane %v1449, 4
        %v1452 = vrot.slane %v1211, 5
        %v1453 = vsel %vm951, %v1451, %v1452
        %s1454 = scalar_lea.vmem %s3, 10
        %v1455 = vld [vmem:[%s1454] sm:$0x3]
        %v1456 = vunpack.c.l.b16 %v1429
        %v1457 = vunpack.c.l.b16 %v1432
        %v1458 = vunpack.c.l.b16 %v1436
        %v1459 = vunpack.c.l.b16 %v1439
        %v1460 = vunpack.c.l.b16 %v1443
        %v1461 = vunpack.c.l.b16 %v1446
        %v1462 = vunpack.c.l.b16 %v1450
        %v1463 = vunpack.c.l.b16 %v1453
        %v1464 = vpack.c.b16 %v1457, %v1456
        %v1465 = vpack.c.b16 %v1459, %v1458
        %v1466 = vpack.c.b16 %v1461, %v1460
        %v1467 = vpack.c.b16 %v1463, %v1462
        %v1469 = vsel %vm755, %v1464, 0
        %v1472 = vsel %vm755, %v1465, 0
        %v1475 = vsel %vm755, %v1466, 0
        %v1478 = vsel %vm755, %v1467, 0
        %v1481 = vsel %vm768, %v1455, 0
        %1483 = vmatprep.subr.bf16.mxu0 0
        %1484 = vmatpush1.bf16.msra.mxu0 %v1481
        %1485 = vmatprep.subr.bf16.mxu0 0
        %1486 = vmatpush1.bf16.msra.mxu0 0
        %1487 = vmatprep.subr.bf16.mxu0 0
        %1488 = vmatpush1.bf16.msra.mxu0 0
        %1489 = vmatprep.subr.bf16.mxu0 0
        %1490 = vmatpush1.bf16.msra.mxu0 0
        %1491 = vmatprep.subr.bf16.mxu0 0
        %1492 = vmatpush1.bf16.msra.mxu0 0
        %1493 = vmatprep.subr.bf16.mxu0 0
        %1494 = vmatpush1.bf16.msra.mxu0 0
        %1495 = vmatprep.subr.bf16.mxu0 0
        %1496 = vmatpush1.bf16.msra.mxu0 0
        %1497 = vmatprep.subr.bf16.mxu0 0
        %1498 = vmatpush1.bf16.msra.mxu0 0
        %1499 = vmatprep.subr.bf16.mxu0 0
        %1500 = vmatpush1.bf16.msra.mxu0 0
        %1501 = vmatprep.subr.bf16.mxu0 0
        %1502 = vmatpush1.bf16.msra.mxu0 0
        %1503 = vmatprep.subr.bf16.mxu0 0
        %1504 = vmatpush1.bf16.msra.mxu0 0
        %1505 = vmatprep.subr.bf16.mxu0 0
        %1506 = vmatpush1.bf16.msra.mxu0 0
        %1507 = vmatprep.subr.bf16.mxu0 0
        %1508 = vmatpush1.bf16.msra.mxu0 0
        %1509 = vmatprep.subr.bf16.mxu0 0
        %1510 = vmatpush1.bf16.msra.mxu0 0
        %1511 = vmatprep.subr.bf16.mxu0 0
        %1512 = vmatpush1.bf16.msra.mxu0 0
        %1513 = vmatprep.subr.bf16.mxu0 0
        %1514 = vmatpush1.bf16.msra.mxu0 0
        %1515 = vmatprep.mubr.bf16.mxu0 0
        %1516 = vmatmul.mubr.bf16.gmra.mrb[0].mxu0 %v1469
        %v1517 = vpop.f32.mrb[0].mxu0
        %v1518 = vadd.f32 0.0, %v1517
        %v1519 = vpop.f32.mrb[0].mxu0
        %v1520 = vpop.f32.mrb[0].mxu0
        %v1521 = vadd.f32 0.0, %v1520
        %v1522 = vpop.f32.mrb[0].mxu0
        %1523 = vmatprep.mubr.bf16.mxu0 0
        %1524 = vmatmul.mubr.bf16.gmra.mrb[0].mxu0 %v1472
        %v1525 = vpop.f32.mrb[0].mxu0
        %v1526 = vadd.f32 0.0, %v1525
        %v1527 = vpop.f32.mrb[0].mxu0
        %v1528 = vpop.f32.mrb[0].mxu0
        %v1529 = vadd.f32 0.0, %v1528
        %v1530 = vpop.f32.mrb[0].mxu0
        %1531 = vmatprep.mubr.bf16.mxu0 0
        %1532 = vmatmul.mubr.bf16.gmra.mrb[0].mxu0 %v1475
        %v1533 = vpop.f32.mrb[0].mxu0
        %v1534 = vadd.f32 0.0, %v1533
        %v1535 = vpop.f32.mrb[0].mxu0
        %v1536 = vpop.f32.mrb[0].mxu0
        %v1537 = vadd.f32 0.0, %v1536
        %v1538 = vpop.f32.mrb[0].mxu0
        %1539 = vmatprep.mubr.bf16.mxu0 0
        %1540 = vmatmul.mubr.bf16.gmra.mrb[0].mxu0 %v1478
        %v1541 = vpop.f32.mrb[0].mxu0
        %v1542 = vadd.f32 0.0, %v1541
        %v1543 = vpop.f32.mrb[0].mxu0
        %v1544 = vpop.f32.mrb[0].mxu0
        %v1545 = vadd.f32 0.0, %v1544
        %v1546 = vpop.f32.mrb[0].mxu0
        %1547 = vdwg.mxu0
        %v1548 = vadd.f32 %v1402, %v1518
        %v1549 = vadd.f32 %v1403, %v1521
        %v1550 = vadd.f32 %v1404, %v1526
        %v1551 = vadd.f32 %v1405, %v1529
        %v1552 = vadd.f32 %v1406, %v1534
        %v1553 = vadd.f32 %v1407, %v1537
        %v1554 = vadd.f32 %v1408, %v1542
        %v1555 = vadd.f32 %v1409, %v1545
        %s1556 = scalar_lea.vmem [#allocation2], 24
        %v1557 = vld [vmem:[%s1556] sm:$0xf]
        %v1558 = vld [vmem:[%s1556 + $0x4] sm:$0xf]
        %v1559 = vld [vmem:[%s1556 + $0xc] sm:$0xf]
        %v1560 = vld [vmem:[%s1556 + $0x10] sm:$0xf]
        %v1561 = vld [vmem:[%s1556 + $0x18] sm:$0xf]
        %v1562 = vld [vmem:[%s1556 + $0x1c] sm:$0xf]
        %v1563 = vld [vmem:[%s1556 + $0x24] sm:$0xf]
        %v1564 = vld [vmem:[%s1556 + $0x28] sm:$0xf]
        %s1565 = scalar_lea.vmem %s3, 12
        %v1566 = vld [vmem:[%s1565] sm:$0x3]
        %v1575 = vunpack.c.l.b16 %v1557
        %v1576 = vunpack.c.l.b16 %v1558
        %v1577 = vunpack.c.l.b16 %v1559
        %v1578 = vunpack.c.l.b16 %v1560
        %v1579 = vunpack.c.l.b16 %v1561
        %v1580 = vunpack.c.l.b16 %v1562
        %v1581 = vunpack.c.l.b16 %v1563
        %v1582 = vunpack.c.l.b16 %v1564
        %v1583 = vpack.c.b16 %v1576, %v1575
        %v1584 = vpack.c.b16 %v1578, %v1577
        %v1585 = vpack.c.b16 %v1580, %v1579
        %v1586 = vpack.c.b16 %v1582, %v1581
        %v1588 = vsel %vm755, %v1583, 0
        %v1591 = vsel %vm755, %v1584, 0
        %v1594 = vsel %vm755, %v1585, 0
        %v1597 = vsel %vm755, %v1586, 0
        %v1600 = vsel %vm768, %v1566, 0
        %1602 = vmatprep.subr.bf16.mxu0 0
        %1603 = vmatpush1.bf16.msra.mxu0 %v1600
        %1604 = vmatprep.subr.bf16.mxu0 0
        %1605 = vmatpush1.bf16.msra.mxu0 0
        %1606 = vmatprep.subr.bf16.mxu0 0
        %1607 = vmatpush1.bf16.msra.mxu0 0
        %1608 = vmatprep.subr.bf16.mxu0 0
        %1609 = vmatpush1.bf16.msra.mxu0 0
        %1610 = vmatprep.subr.bf16.mxu0 0
        %1611 = vmatpush1.bf16.msra.mxu0 0
        %1612 = vmatprep.subr.bf16.mxu0 0
        %1613 = vmatpush1.bf16.msra.mxu0 0
        %1614 = vmatprep.subr.bf16.mxu0 0
        %1615 = vmatpush1.bf16.msra.mxu0 0
        %1616 = vmatprep.subr.bf16.mxu0 0
        %1617 = vmatpush1.bf16.msra.mxu0 0
        %1618 = vmatprep.subr.bf16.mxu0 0
        %1619 = vmatpush1.bf16.msra.mxu0 0
        %1620 = vmatprep.subr.bf16.mxu0 0
        %1621 = vmatpush1.bf16.msra.mxu0 0
        %1622 = vmatprep.subr.bf16.mxu0 0
        %1623 = vmatpush1.bf16.msra.mxu0 0
        %1624 = vmatprep.subr.bf16.mxu0 0
        %1625 = vmatpush1.bf16.msra.mxu0 0
        %1626 = vmatprep.subr.bf16.mxu0 0
        %1627 = vmatpush1.bf16.msra.mxu0 0
        %1628 = vmatprep.subr.bf16.mxu0 0
        %1629 = vmatpush1.bf16.msra.mxu0 0
        %1630 = vmatprep.subr.bf16.mxu0 0
        %1631 = vmatpush1.bf16.msra.mxu0 0
        %1632 = vmatprep.subr.bf16.mxu0 0
        %1633 = vmatpush1.bf16.msra.mxu0 0
        %1634 = vmatprep.mubr.bf16.mxu0 0
        %1635 = vmatmul.mubr.bf16.gmra.mrb[0].mxu0 %v1588
        %v1636 = vpop.f32.mrb[0].mxu0
        %v1637 = vadd.f32 0.0, %v1636
        %v1638 = vpop.f32.mrb[0].mxu0
        %v1639 = vpop.f32.mrb[0].mxu0
        %v1640 = vadd.f32 0.0, %v1639
        %v1641 = vpop.f32.mrb[0].mxu0
        %1642 = vmatprep.mubr.bf16.mxu0 0
        %1643 = vmatmul.mubr.bf16.gmra.mrb[0].mxu0 %v1591
        %v1644 = vpop.f32.mrb[0].mxu0
        %v1645 = vadd.f32 0.0, %v1644
        %v1646 = vpop.f32.mrb[0].mxu0
        %v1647 = vpop.f32.mrb[0].mxu0
        %v1648 = vadd.f32 0.0, %v1647
        %v1649 = vpop.f32.mrb[0].mxu0
        %1650 = vmatprep.mubr.bf16.mxu0 0
        %1651 = vmatmul.mubr.bf16.gmra.mrb[0].mxu0 %v1594
        %v1652 = vpop.f32.mrb[0].mxu0
        %v1653 = vadd.f32 0.0, %v1652
        %v1654 = vpop.f32.mrb[0].mxu0
        %v1655 = vpop.f32.mrb[0].mxu0
        %v1656 = vadd.f32 0.0, %v1655
        %v1657 = vpop.f32.mrb[0].mxu0
        %1658 = vmatprep.mubr.bf16.mxu0 0
        %1659 = vmatmul.mubr.bf16.gmra.mrb[0].mxu0 %v1597
        %v1660 = vpop.f32.mrb[0].mxu0
        %v1661 = vadd.f32 0.0, %v1660
        %v1662 = vpop.f32.mrb[0].mxu0
        %v1663 = vpop.f32.mrb[0].mxu0
        %v1664 = vadd.f32 0.0, %v1663
        %v1665 = vpop.f32.mrb[0].mxu0
        %1666 = vdwg.mxu0
        %v1667 = vadd.f32 %v1548, %v1637
        %v1668 = vadd.f32 %v1549, %v1640
        %v1669 = vadd.f32 %v1550, %v1645
        %v1670 = vadd.f32 %v1551, %v1648
        %v1671 = vadd.f32 %v1552, %v1653
        %v1672 = vadd.f32 %v1553, %v1656
        %v1673 = vadd.f32 %v1554, %v1661
        %v1674 = vadd.f32 %v1555, %v1664
        %v1675 = vld [vmem:[%s1556] sm:$0xf]
        %v1676 = vld [vmem:[%s1556 + $0x4] sm:$0xf]
        %v1677 = vld [vmem:[%s1556 + $0x8] sm:$0x1]
        %v1678 = vld [vmem:[%s1556 + $0xc] sm:$0xf]
        %v1679 = vld [vmem:[%s1556 + $0x10] sm:$0xf]
        %v1680 = vld [vmem:[%s1556 + $0x14] sm:$0x1]
        %v1681 = vld [vmem:[%s1556 + $0x18] sm:$0xf]
        %v1682 = vld [vmem:[%s1556 + $0x1c] sm:$0xf]
        %v1683 = vld [vmem:[%s1556 + $0x20] sm:$0x1]
        %v1684 = vld [vmem:[%s1556 + $0x24] sm:$0xf]
        %v1685 = vld [vmem:[%s1556 + $0x28] sm:$0xf]
        %v1686 = vld [vmem:[%s1556 + $0x2c] sm:$0x1]
        %v1688 = vshrl.u32 %v1675, 16
        %v1690 = vrot.slane %v1688, 4
        %v1691 = vshll.u32 %v1675, 16
        %v1693 = vrot.slane %v1691, 5
        %v1694 = vor.u32 %v1690, %v1693
        %v1695 = vrot.slane %v1694, 4
        %v1697 = vshll.u32 %v1676, 16
        %v1699 = vrot.slane %v1697, 5
        %v1700 = vsel %vm644, %v1695, %v1699
        %v1701 = vshrl.u32 %v1676, 16
        %v1703 = vrot.slane %v1701, 4
        %v1704 = vor.u32 %v1703, %v1699
        %v1705 = vrot.slane %v1704, 4
        %v1707 = vshll.u32 %v1677, 16
        %v1709 = vrot.slane %v1707, 5
        %v1710 = vsel %vm644, %v1705, %v1709
        %v1712 = vshrl.u32 %v1678, 16
        %v1714 = vrot.slane %v1712, 4
        %v1715 = vshll.u32 %v1678, 16
        %v1717 = vrot.slane %v1715, 5
        %v1718 = vor.u32 %v1714, %v1717
        %v1719 = vrot.slane %v1718, 4
        %v1721 = vshll.u32 %v1679, 16
        %v1723 = vrot.slane %v1721, 5
        %v1724 = vsel %vm644, %v1719, %v1723
        %v1725 = vshrl.u32 %v1679, 16
        %v1727 = vrot.slane %v1725, 4
        %v1728 = vor.u32 %v1727, %v1723
        %v1729 = vrot.slane %v1728, 4
        %v1731 = vshll.u32 %v1680, 16
        %v1733 = vrot.slane %v1731, 5
        %v1734 = vsel %vm644, %v1729, %v1733
        %v1736 = vshrl.u32 %v1681, 16
        %v1738 = vrot.slane %v1736, 4
        %v1739 = vshll.u32 %v1681, 16
        %v1741 = vrot.slane %v1739, 5
        %v1742 = vor.u32 %v1738, %v1741
        %v1743 = vrot.slane %v1742, 4
        %v1745 = vshll.u32 %v1682, 16
        %v1747 = vrot.slane %v1745, 5
        %v1748 = vsel %vm644, %v1743, %v1747
        %v1749 = vshrl.u32 %v1682, 16
        %v1751 = vrot.slane %v1749, 4
        %v1752 = vor.u32 %v1751, %v1747
        %v1753 = vrot.slane %v1752, 4
        %v1755 = vshll.u32 %v1683, 16
        %v1757 = vrot.slane %v1755, 5
        %v1758 = vsel %vm644, %v1753, %v1757
        %v1760 = vshrl.u32 %v1684, 16
        %v1762 = vrot.slane %v1760, 4
        %v1763 = vshll.u32 %v1684, 16
        %v1765 = vrot.slane %v1763, 5
        %v1766 = vor.u32 %v1762, %v1765
        %v1767 = vrot.slane %v1766, 4
        %v1769 = vshll.u32 %v1685, 16
        %v1771 = vrot.slane %v1769, 5
        %v1772 = vsel %vm644, %v1767, %v1771
        %v1773 = vshrl.u32 %v1685, 16
        %v1775 = vrot.slane %v1773, 4
        %v1776 = vor.u32 %v1775, %v1771
        %v1777 = vrot.slane %v1776, 4
        %v1779 = vshll.u32 %v1686, 16
        %v1781 = vrot.slane %v1779, 5
        %v1782 = vsel %vm644, %v1777, %v1781
        %s1783 = scalar_lea.vmem %s3, 14
        %v1784 = vld [vmem:[%s1783] sm:$0x3]
        %v1785 = vunpack.c.l.b16 %v1700
        %v1786 = vunpack.c.l.b16 %v1710
        %v1787 = vunpack.c.l.b16 %v1724
        %v1788 = vunpack.c.l.b16 %v1734
        %v1789 = vunpack.c.l.b16 %v1748
        %v1790 = vunpack.c.l.b16 %v1758
        %v1791 = vunpack.c.l.b16 %v1772
        %v1792 = vunpack.c.l.b16 %v1782
        %v1793 = vpack.c.b16 %v1786, %v1785
        %v1794 = vpack.c.b16 %v1788, %v1787
        %v1795 = vpack.c.b16 %v1790, %v1789
        %v1796 = vpack.c.b16 %v1792, %v1791
        %v1798 = vsel %vm755, %v1793, 0
        %v1801 = vsel %vm755, %v1794, 0
        %v1804 = vsel %vm755, %v1795, 0
        %v1807 = vsel %vm755, %v1796, 0
        %v1810 = vsel %vm768, %v1784, 0
        %1812 = vmatprep.subr.bf16.mxu0 0
        %1813 = vmatpush1.bf16.msra.mxu0 %v1810
        %1814 = vmatprep.subr.bf16.mxu0 0
        %1815 = vmatpush1.bf16.msra.mxu0 0
        %1816 = vmatprep.subr.bf16.mxu0 0
        %1817 = vmatpush1.bf16.msra.mxu0 0
        %1818 = vmatprep.subr.bf16.mxu0 0
        %1819 = vmatpush1.bf16.msra.mxu0 0
        %1820 = vmatprep.subr.bf16.mxu0 0
        %1821 = vmatpush1.bf16.msra.mxu0 0
        %1822 = vmatprep.subr.bf16.mxu0 0
        %1823 = vmatpush1.bf16.msra.mxu0 0
        %1824 = vmatprep.subr.bf16.mxu0 0
        %1825 = vmatpush1.bf16.msra.mxu0 0
        %1826 = vmatprep.subr.bf16.mxu0 0
        %1827 = vmatpush1.bf16.msra.mxu0 0
        %1828 = vmatprep.subr.bf16.mxu0 0
        %1829 = vmatpush1.bf16.msra.mxu0 0
        %1830 = vmatprep.subr.bf16.mxu0 0
        %1831 = vmatpush1.bf16.msra.mxu0 0
        %1832 = vmatprep.subr.bf16.mxu0 0
        %1833 = vmatpush1.bf16.msra.mxu0 0
        %1834 = vmatprep.subr.bf16.mxu0 0
        %1835 = vmatpush1.bf16.msra.mxu0 0
        %1836 = vmatprep.subr.bf16.mxu0 0
        %1837 = vmatpush1.bf16.msra.mxu0 0
        %1838 = vmatprep.subr.bf16.mxu0 0
        %1839 = vmatpush1.bf16.msra.mxu0 0
        %1840 = vmatprep.subr.bf16.mxu0 0
        %1841 = vmatpush1.bf16.msra.mxu0 0
        %1842 = vmatprep.subr.bf16.mxu0 0
        %1843 = vmatpush1.bf16.msra.mxu0 0
        %1844 = vmatprep.mubr.bf16.mxu0 0
        %1845 = vmatmul.mubr.bf16.gmra.mrb[0].mxu0 %v1798
        %v1846 = vpop.f32.mrb[0].mxu0
        %v1847 = vadd.f32 0.0, %v1846
        %v1848 = vpop.f32.mrb[0].mxu0
        %v1849 = vpop.f32.mrb[0].mxu0
        %v1850 = vadd.f32 0.0, %v1849
        %v1851 = vpop.f32.mrb[0].mxu0
        %1852 = vmatprep.mubr.bf16.mxu0 0
        %1853 = vmatmul.mubr.bf16.gmra.mrb[0].mxu0 %v1801
        %v1854 = vpop.f32.mrb[0].mxu0
        %v1855 = vadd.f32 0.0, %v1854
        %v1856 = vpop.f32.mrb[0].mxu0
        %v1857 = vpop.f32.mrb[0].mxu0
        %v1858 = vadd.f32 0.0, %v1857
        %v1859 = vpop.f32.mrb[0].mxu0
        %1860 = vmatprep.mubr.bf16.mxu0 0
        %1861 = vmatmul.mubr.bf16.gmra.mrb[0].mxu0 %v1804
        %v1862 = vpop.f32.mrb[0].mxu0
        %v1863 = vadd.f32 0.0, %v1862
        %v1864 = vpop.f32.mrb[0].mxu0
        %v1865 = vpop.f32.mrb[0].mxu0
        %v1866 = vadd.f32 0.0, %v1865
        %v1867 = vpop.f32.mrb[0].mxu0
        %1868 = vmatprep.mubr.bf16.mxu0 0
        %1869 = vmatmul.mubr.bf16.gmra.mrb[0].mxu0 %v1807
        %v1870 = vpop.f32.mrb[0].mxu0
        %v1871 = vadd.f32 0.0, %v1870
        %v1872 = vpop.f32.mrb[0].mxu0
        %v1873 = vpop.f32.mrb[0].mxu0
        %v1874 = vadd.f32 0.0, %v1873
        %v1875 = vpop.f32.mrb[0].mxu0
        %1876 = vdwg.mxu0
        %v1877 = vadd.f32 %v1667, %v1847
        %v1878 = vadd.f32 %v1668, %v1850
        %v1879 = vadd.f32 %v1669, %v1855
        %v1880 = vadd.f32 %v1670, %v1858
        %v1881 = vadd.f32 %v1671, %v1863
        %v1882 = vadd.f32 %v1672, %v1866
        %v1883 = vadd.f32 %v1673, %v1871
        %v1884 = vadd.f32 %v1674, %v1874
        %v1885 = vld [vmem:[%s1556] sm:$0xe]
        %v1886 = vld [vmem:[%s1556 + $0xc] sm:$0xe]
        %v1887 = vld [vmem:[%s1556 + $0x18] sm:$0xe]
        %v1888 = vld [vmem:[%s1556 + $0x24] sm:$0xe]
        %v1901 = vrot.slane %v1885, 5
        %v1902 = vrot.slane %v1901, 4
        %v1903 = vrot.slane %v1676, 5
        %v1904 = vsel %vm951, %v1902, %v1903
        %v1905 = vrot.slane %v1903, 4
        %v1906 = vrot.slane %v1677, 5
        %v1907 = vsel %vm951, %v1905, %v1906
        %v1908 = vrot.slane %v1886, 5
        %v1909 = vrot.slane %v1908, 4
        %v1910 = vrot.slane %v1679, 5
        %v1911 = vsel %vm951, %v1909, %v1910
        %v1912 = vrot.slane %v1910, 4
        %v1913 = vrot.slane %v1680, 5
        %v1914 = vsel %vm951, %v1912, %v1913
        %v1915 = vrot.slane %v1887, 5
        %v1916 = vrot.slane %v1915, 4
        %v1917 = vrot.slane %v1682, 5
        %v1918 = vsel %vm951, %v1916, %v1917
        %v1919 = vrot.slane %v1917, 4
        %v1920 = vrot.slane %v1683, 5
        %v1921 = vsel %vm951, %v1919, %v1920
        %v1922 = vrot.slane %v1888, 5
        %v1923 = vrot.slane %v1922, 4
        %v1924 = vrot.slane %v1685, 5
        %v1925 = vsel %vm951, %v1923, %v1924
        %v1926 = vrot.slane %v1924, 4
        %v1927 = vrot.slane %v1686, 5
        %v1928 = vsel %vm951, %v1926, %v1927
        %s1929 = scalar_lea.vmem %s3, 16
        %v1930 = vld [vmem:[%s1929] sm:$0x3]
        %v1931 = vunpack.c.l.b16 %v1904
        %v1932 = vunpack.c.l.b16 %v1907
        %v1933 = vunpack.c.l.b16 %v1911
        %v1934 = vunpack.c.l.b16 %v1914
        %v1935 = vunpack.c.l.b16 %v1918
        %v1936 = vunpack.c.l.b16 %v1921
        %v1937 = vunpack.c.l.b16 %v1925
        %v1938 = vunpack.c.l.b16 %v1928
        %v1939 = vpack.c.b16 %v1932, %v1931
        %v1940 = vpack.c.b16 %v1934, %v1933
        %v1941 = vpack.c.b16 %v1936, %v1935
        %v1942 = vpack.c.b16 %v1938, %v1937
        %v1944 = vsel %vm755, %v1939, 0
        %v1947 = vsel %vm755, %v1940, 0
        %v1950 = vsel %vm755, %v1941, 0
        %v1953 = vsel %vm755, %v1942, 0
        %v1956 = vsel %vm768, %v1930, 0
        %1958 = vmatprep.subr.bf16.mxu0 0
        %1959 = vmatpush1.bf16.msra.mxu0 %v1956
        %1960 = vmatprep.subr.bf16.mxu0 0
        %1961 = vmatpush1.bf16.msra.mxu0 0
        %1962 = vmatprep.subr.bf16.mxu0 0
        %1963 = vmatpush1.bf16.msra.mxu0 0
        %1964 = vmatprep.subr.bf16.mxu0 0
        %1965 = vmatpush1.bf16.msra.mxu0 0
        %1966 = vmatprep.subr.bf16.mxu0 0
        %1967 = vmatpush1.bf16.msra.mxu0 0
        %1968 = vmatprep.subr.bf16.mxu0 0
        %1969 = vmatpush1.bf16.msra.mxu0 0
        %1970 = vmatprep.subr.bf16.mxu0 0
        %1971 = vmatpush1.bf16.msra.mxu0 0
        %1972 = vmatprep.subr.bf16.mxu0 0
        %1973 = vmatpush1.bf16.msra.mxu0 0
        %1974 = vmatprep.subr.bf16.mxu0 0
        %1975 = vmatpush1.bf16.msra.mxu0 0
        %1976 = vmatprep.subr.bf16.mxu0 0
        %1977 = vmatpush1.bf16.msra.mxu0 0
        %1978 = vmatprep.subr.bf16.mxu0 0
        %1979 = vmatpush1.bf16.msra.mxu0 0
        %1980 = vmatprep.subr.bf16.mxu0 0
        %1981 = vmatpush1.bf16.msra.mxu0 0
        %1982 = vmatprep.subr.bf16.mxu0 0
        %1983 = vmatpush1.bf16.msra.mxu0 0
        %1984 = vmatprep.subr.bf16.mxu0 0
        %1985 = vmatpush1.bf16.msra.mxu0 0
        %1986 = vmatprep.subr.bf16.mxu0 0
        %1987 = vmatpush1.bf16.msra.mxu0 0
        %1988 = vmatprep.subr.bf16.mxu0 0
        %1989 = vmatpush1.bf16.msra.mxu0 0
        %1990 = vmatprep.mubr.bf16.mxu0 0
        %1991 = vmatmul.mubr.bf16.gmra.mrb[0].mxu0 %v1944
        %v1992 = vpop.f32.mrb[0].mxu0
        %v1993 = vadd.f32 0.0, %v1992
        %v1994 = vpop.f32.mrb[0].mxu0
        %v1995 = vpop.f32.mrb[0].mxu0
        %v1996 = vadd.f32 0.0, %v1995
        %v1997 = vpop.f32.mrb[0].mxu0
        %1998 = vmatprep.mubr.bf16.mxu0 0
        %1999 = vmatmul.mubr.bf16.gmra.mrb[0].mxu0 %v1947
        %v2000 = vpop.f32.mrb[0].mxu0
        %v2001 = vadd.f32 0.0, %v2000
        %v2002 = vpop.f32.mrb[0].mxu0
        %v2003 = vpop.f32.mrb[0].mxu0
        %v2004 = vadd.f32 0.0, %v2003
        %v2005 = vpop.f32.mrb[0].mxu0
        %2006 = vmatprep.mubr.bf16.mxu0 0
        %2007 = vmatmul.mubr.bf16.gmra.mrb[0].mxu0 %v1950
        %v2008 = vpop.f32.mrb[0].mxu0
        %v2009 = vadd.f32 0.0, %v2008
        %v2010 = vpop.f32.mrb[0].mxu0
        %v2011 = vpop.f32.mrb[0].mxu0
        %v2012 = vadd.f32 0.0, %v2011
        %v2013 = vpop.f32.mrb[0].mxu0
        %2014 = vmatprep.mubr.bf16.mxu0 0
        %2015 = vmatmul.mubr.bf16.gmra.mrb[0].mxu0 %v1953
        %v2016 = vpop.f32.mrb[0].mxu0
        %v2017 = vadd.f32 0.0, %v2016
        %v2018 = vpop.f32.mrb[0].mxu0
        %v2019 = vpop.f32.mrb[0].mxu0
        %v2020 = vadd.f32 0.0, %v2019
        %v2021 = vpop.f32.mrb[0].mxu0
        %2022 = vdwg.mxu0
        %v2023 = vadd.f32 %v1877, %v1993
        %v2024 = vadd.f32 %v1878, %v1996
        %v2025 = vadd.f32 %v1879, %v2001
        %v2026 = vadd.f32 %v1880, %v2004
        %v2027 = vadd.f32 %v1881, %v2009
        %v2028 = vadd.f32 %v1882, %v2012
        %v2029 = vadd.f32 %v1883, %v2017
        %v2030 = vadd.f32 %v1884, %v2020
        %v2031 = vadd.f32 %v2023, %v2024
        %v2032 = vadd.f32 %v2031, %v2025
        %v2033 = vadd.f32 %v2032, %v2026
        %v2034 = vadd.f32 %v2033, %v2027
        %v2035 = vadd.f32 %v2034, %v2028
        %v2036 = vadd.f32 %v2035, %v2029
        %v2037 = vadd.f32 %v2036, %v2030
        %v2038 = vrot.slane %v2037, 4
        %v2039 = vadd.f32 %v2037, %v2038
        %v2040 = vrot.slane %v2039, 2
        %v2041 = vadd.f32 %v2039, %v2040
        %v2042 = vrot.slane %v2041, 1
        %v2043 = vadd.f32 %v2041, %v2042
        %v2044 = vmul.f32 %v2043, 0.015625
        %v2045 = vsub.f32 %v2023, %v2044
        %v2046 = vsub.f32 %v2024, %v2044
        %v2047 = vsub.f32 %v2025, %v2044
        %v2048 = vsub.f32 %v2026, %v2044
        %v2049 = vsub.f32 %v2027, %v2044
        %v2050 = vsub.f32 %v2028, %v2044
        %v2051 = vsub.f32 %v2029, %v2044
        %v2052 = vsub.f32 %v2030, %v2044
        %v2053 = vmul.f32 %v2045, %v2045
        %v2054 = vmul.f32 %v2046, %v2046
        %v2055 = vmul.f32 %v2047, %v2047
        %v2056 = vmul.f32 %v2048, %v2048
        %v2057 = vmul.f32 %v2049, %v2049
        %v2058 = vmul.f32 %v2050, %v2050
        %v2059 = vmul.f32 %v2051, %v2051
        %v2060 = vmul.f32 %v2052, %v2052
        %v2061 = vadd.f32 %v2053, %v2054
        %v2062 = vadd.f32 %v2061, %v2055
        %v2063 = vadd.f32 %v2062, %v2056
        %v2064 = vadd.f32 %v2063, %v2057
        %v2065 = vadd.f32 %v2064, %v2058
        %v2066 = vadd.f32 %v2065, %v2059
        %v2067 = vadd.f32 %v2066, %v2060
        %v2068 = vrot.slane %v2067, 4
        %v2069 = vadd.f32 %v2067, %v2068
        %v2070 = vrot.slane %v2069, 2
        %v2071 = vadd.f32 %v2069, %v2070
        %v2072 = vrot.slane %v2071, 1
        %v2073 = vadd.f32 %v2071, %v2072
        %2074 = vst [vmem:[%s347] sm:$0x1] %v2044
        %2075 = vst [vmem:[%s347 + $0x1] sm:$0x1] %v2073
        %v2076 = vpack.c.bf16 %v2024, %v2023
        %v2077 = vpack.c.bf16 %v2026, %v2025
        %v2078 = vpack.c.bf16 %v2028, %v2027
        %v2079 = vpack.c.bf16 %v2030, %v2029
        %v2084 = vunpack.c.l.b16 %v2076
        %v2085 = vunpack.c.h.b16 %v2076
        %v2086 = vunpack.c.l.b16 %v2077
        %v2087 = vunpack.c.h.b16 %v2077
        %v2088 = vunpack.c.l.b16 %v2078
        %v2089 = vunpack.c.h.b16 %v2078
        %v2090 = vunpack.c.l.b16 %v2079
        %v2091 = vunpack.c.h.b16 %v2079
        %v2092 = vpack.c.b16 %v2084, %v2084
        %v2093 = vpack.c.b16 %v2085, %v2085
        %v2094 = vpack.c.b16 %v2086, %v2086
        %v2095 = vpack.c.b16 %v2087, %v2087
        %v2096 = vpack.c.b16 %v2088, %v2088
        %v2097 = vpack.c.b16 %v2089, %v2089
        %v2098 = vpack.c.b16 %v2090, %v2090
        %v2099 = vpack.c.b16 %v2091, %v2091
        %2108 = vst [vmem:[%s340] sm:$0xf] %v2092
        %2109 = vst [vmem:[%s340 + $0x4] sm:$0xf] %v2093
        %2110 = vst [vmem:[%s340 + $0x8] sm:$0xf] %v2094
        %2111 = vst [vmem:[%s340 + $0xc] sm:$0xf] %v2095
        %2112 = vst [vmem:[%s340 + $0x10] sm:$0xf] %v2096
        %2113 = vst [vmem:[%s340 + $0x14] sm:$0xf] %v2097
        %2114 = vst [vmem:[%s340 + $0x18] sm:$0xf] %v2098
        %2115 = vst [vmem:[%s340 + $0x1c] sm:$0xf] %v2099
        %s2116 = sand.u32 %s166, 1
        %s2117 = scalar_lea.sflag [#allocation4], %s2116
        %s2118 = sand.u32 %s166, 1
        %s2119 = smul.addr %s2118, 32
        %s2120 = scalar_lea.vmem [#allocation3], %s2119
        %s2121 = sand.u32 %s194, 1
        %s2122 = scalar_lea.sflag [#allocation6], %s2121
        %s2123 = sand.u32 %s194, 1
        %s2124 = smul.addr %s2123, 2
        %s2125 = scalar_lea.vmem [#allocation5], %s2124
        // Predicated region
        $region37: #{tpu_custom_call.1} parent=35 // pred_check
          %p2126 = pneg %p176
        $region38: #{tpu_custom_call.1} parent=35 // pred_check_branch
          %2128 = sbr.rel (%p2126) target = $region40
        $region39: #{tpu_custom_call.1} parent=35 // pred_region
          %s2129 = smul.u32 8, %s28
          %s2131 = ssub.s32 512, 512
          %2132 = vsyncadd %s2117, %s2131
          %s2133 = smul.addr %s27, 32
          %s2134 = sadd.s32 %s2129, %s2133
          %s2135 = smul.addr %s2134, 64
          %s2136 = scalar_lea.hbm %s4, %s2135
          %s2137 = sshll.u32 %s2120, 4
          %s2138 = int_to_ptr.vmem [resolvable:$true] %s2137
          %2143 = dma.vmem_to_hbm [thread:$0]  %s2138, 512, %s2136, %s2117, 64, 64, 4
        $region40: #{tpu_custom_call.1} parent=35 // pred_fallthru
          _
        // Predicated region
        $region41: #{tpu_custom_call.1} parent=35 // pred_check
          %p2144 = pneg %p204
        $region42: #{tpu_custom_call.1} parent=35 // pred_check_branch
          %2146 = sbr.rel (%p2144) target = $region44
        $region43: #{tpu_custom_call.1} parent=35 // pred_region
          %s2148 = ssub.s32 32, 32
          %2149 = vsyncadd %s2122, %s2148
          %s2150 = smul.addr %s27, 4
          %s2151 = sadd.s32 %s28, %s2150
          %s2152 = smul.addr %s2151, 32
          %s2153 = scalar_lea.hbm %s5, %s2152
          %s2155 = sshll.u32 %s2125, 4
          %s2156 = int_to_ptr.vmem [resolvable:$true] %s2155
          %2158 = dma.vmem_to_hbm [thread:$0]  %s2156, 32, %s2153, %s2122
        $region44: #{tpu_custom_call.1} parent=35 // pred_fallthru
          _
      $region36: #{tpu_custom_call.1} parent=5 // pred_fallthru
        _
      %p2159 = scmp.le.s32.totalorder 2, %s18
      // Predicated region
      $region45: #{tpu_custom_call.1} parent=5 // pred_check
        %p2160 = pneg %p2159
      $region46: #{tpu_custom_call.1} parent=5 // pred_check_branch
        %2162 = sbr.rel (%p2160) target = $region48
      $region47: #{tpu_custom_call.1} parent=5 // pred_region
        %s2163 = ssub.s32 %s18, 2
        // Predicated region
        $region49: #{tpu_custom_call.1} parent=47 // pred_check
          %p2164 = pneg %p182
        $region50: #{tpu_custom_call.1} parent=47 // pred_check_branch
          %2166 = sbr.rel (%p2164) target = $region52
        $region51: #{tpu_custom_call.1} parent=47 // pred_region
          %s2167 = sand.u32 %s167, 1
          %s2168 = scalar_lea.sflag [#allocation4], %s2167
          %s2169 = sand.u32 %s167, 1
          %s2170 = smul.addr %s2169, 32
          %s2171 = scalar_lea.vmem [#allocation3], %s2170
          %2172 = dma.done %s2168, 512
        $region52: #{tpu_custom_call.1} parent=47 // pred_fallthru
          _
        // Predicated region
        $region53: #{tpu_custom_call.1} parent=47 // pred_check
          %p2173 = pneg %p210
        $region54: #{tpu_custom_call.1} parent=47 // pred_check_branch
          %2175 = sbr.rel (%p2173) target = $region56
        $region55: #{tpu_custom_call.1} parent=47 // pred_region
          %s2176 = sand.u32 %s195, 1
          %s2177 = scalar_lea.sflag [#allocation6], %s2176
          %s2178 = sand.u32 %s195, 1
          %s2179 = smul.addr %s2178, 2
          %s2180 = scalar_lea.vmem [#allocation5], %s2179
          %2181 = dma.done %s2177, 32
        $region56: #{tpu_custom_call.1} parent=47 // pred_fallthru
          _
      $region48: #{tpu_custom_call.1} parent=5 // pred_fallthru
        _
    $region6: #{tpu_custom_call.1} parent=1 // loop_footer
      %s22 = sadd.s32 1, %s18
    $region7: #{tpu_custom_call.1} parent=1 // loop_footer_branch
      %17 = sbr.rel target = $region3
    $region8: #{tpu_custom_call.1} parent=1 // loop_exit
      _
    %2182 = vsyncpa [#allocation4], 1
    %s2183 = scalar_lea.sflag [#allocation4], 1
    %2184 = vsyncpa %s2183, 1
    %2185 = vsyncpa [#allocation6], 1
    %s2186 = scalar_lea.sflag [#allocation6], 1
    %2187 = vsyncpa %s2186, 1

</llo_original>
